<compile_context>
chip_gen: v7x
topology: tpu7x:2x2x1
jax: 0.10.0
libtpu: 0.0.40
codegen_flags: <defaults>
</compile_context>

<pallas_src>
import functools

import numpy as np
import jax
import jax.numpy as jnp
from jax.experimental import pallas as pl
from jax.experimental.pallas import tpu as pltpu


# -----------------------------------------------------------------------------
# Pallas GRU kernel (one grid step == one time chunk of TT timesteps)
# -----------------------------------------------------------------------------
def gru_block_kernel(x_ref, wih_ref, whh_ref, bgi_ref, bhn_ref, out_ref,
                     gi_s, h_s, *, seq_len, mask_tail, unroll):
    """Process TT timesteps of the GRU recurrence for one batch chunk.

    x_ref   : (TT, BB, Hp) bf16   embedded inputs, time-major, padded
    wih_ref : (Hp, 3Hp)    bf16   W_ih^T, gates (r,z,n) each in a 128-aligned block
    whh_ref : (Hp, 3Hp)    bf16   W_hh^T
    bgi_ref : (1, 3Hp)     f32    b_ih + [b_hh_r, b_hh_z, 0]   (folded)
    bhn_ref : (1, Hp)      f32    b_hh_n (must stay inside the r* term)
    out_ref : (TT, BB, Hp) bf16   GRU outputs for this chunk
    gi_s    : (TT, BB, 3Hp) f32   VMEM scratch: hoisted input projection
    h_s     : (BB, Hp)     f32    VMEM scratch: hidden carried ACROSS chunks
    """
    tc = pl.program_id(1)                      # time-chunk index (innermost axis)
    TT, BB, Hp = x_ref.shape

    @pl.when(tc == 0)
    def _():
        h_s[...] = jnp.zeros_like(h_s)

    # ---- Hoisted input projection: one big MXU matmul for the whole chunk ----
    # Biases for the r/z gates (b_ih + b_hh_{r,z}) are already folded into bgi.
    x = x_ref[...].reshape(TT * BB, Hp).astype(wih_ref.dtype)
    gi = jnp.dot(x, wih_ref[...], preferred_element_type=jnp.float32) + bgi_ref[...]
    gi_s[...] = gi.reshape(TT, BB, 3 * Hp)

    # Hoisted loop invariants (broadcasts are not CSE'd by JAX).
    w_hh = whh_ref[...]                                   # (Hp, 3Hp) bf16
    b_hn = jnp.broadcast_to(bhn_ref[...], (BB, Hp))       # (BB, Hp)  f32

    # TODO(synk): for very large Hp a weight-stationary MXU loop
    # (pltpu.matmul_push_rhs / matmul_acc_lhs / matmul_pop) would avoid
    # re-streaming W_hh tiles every timestep; jnp.dot is used for robustness.
    def step(j, h):
        # h lives in vregs (fori carry) — no per-step VMEM round trip.
        gh = jnp.dot(h.astype(w_hh.dtype), w_hh,
                     preferred_element_type=jnp.float32)  # (BB, 3Hp) f32
        g = gi_s[j]                                       # (BB, 3Hp) f32

        # 128-aligned gate slices (free views). Gate order r, z, n (PyTorch).
        r = jax.nn.sigmoid(g[:, 0 * Hp:1 * Hp] + gh[:, 0 * Hp:1 * Hp])
        z = jax.nn.sigmoid(g[:, 1 * Hp:2 * Hp] + gh[:, 1 * Hp:2 * Hp])
        n = jnp.tanh(g[:, 2 * Hp:3 * Hp] + r * (gh[:, 2 * Hp:3 * Hp] + b_hn))
        h_new = (1.0 - z) * n + z * h

        if mask_tail:
            # Only emitted when T % TT != 0: keep carried state exact on the
            # padded tail timesteps.
            t_glob = tc * TT + j
            h_new = jnp.where(t_glob < seq_len, h_new, h)

        out_ref[j] = h_new.astype(out_ref.dtype)
        return h_new

    h_final = jax.lax.fori_loop(0, TT, step, h_s[...], unroll=unroll)
    h_s[...] = h_final          # single store per chunk (carried to next chunk)


def _round_up(x, m):
    return (x + m - 1) // m * m


def _pad_gate_matrix(w_t, H, Hp, dtype):
    """(H, 3H) -> (Hp, 3Hp); gate g's block placed at columns [g*Hp, g*Hp+H)."""
    out = jnp.zeros((Hp, 3 * Hp), dtype)
    for g in range(3):
        out = out.at[:H, g * Hp:g * Hp + H].set(w_t[:, g * H:(g + 1) * H].astype(dtype))
    return out


def _pad_gate_bias_blocks(b_row, H, Hp):
    """(1, 3H) f32 -> (1, 3Hp) f32 with each gate in its own 128-aligned block."""
    out = jnp.zeros((1, 3 * Hp), jnp.float32)
    for g in range(3):
        out = out.at[0, g * Hp:g * Hp + H].set(b_row[0, g * H:(g + 1) * H])
    return out


# -----------------------------------------------------------------------------
# pallas_call wrapper (time-major in / time-major out, padded)
# -----------------------------------------------------------------------------
def gru_forward_pallas(x_tm, wih_p, whh_p, b_gi_p, b_hn_p, *, hidden_size,
                       time_block=32, max_batch_block=256,
                       matmul_dtype=jnp.bfloat16, out_dtype=jnp.bfloat16):
    """x_tm: (T, B, H) f32 time-major embedded input (unpadded).
    Returns padded, time-major GRU outputs (Tp, Bp, Hp) in out_dtype."""
    T, B, H = x_tm.shape
    assert H == hidden_size
    Hp = wih_p.shape[0]
    assert wih_p.shape == (Hp, 3 * Hp) and Hp % 128 == 0
    assert max_batch_block % 8 == 0

    # Whole padded batch in one grid step when it fits (review: >=128/256 LHS
    # rows for the recurrent matmul; at minimum no 8-row chunking).
    BB = _round_up(B, 8)
    if BB > max_batch_block:
        BB = max_batch_block
    Bp = _round_up(B, BB)
    nb = Bp // BB

    TT = min(T, time_block)
    nt = pl.cdiv(T, TT)
    Tp = nt * TT
    mask_tail = (T % TT) != 0

    x = jnp.pad(x_tm, ((0, Tp - T), (0, Bp - B), (0, Hp - H))).astype(matmul_dtype)

    kernel = functools.partial(gru_block_kernel, seq_len=T, mask_tail=mask_tail,
                               unroll=min(TT, 8))

    itm = jnp.dtype(matmul_dtype).itemsize
    ito = jnp.dtype(out_dtype).itemsize

    # Resident, constant-index weights: single-buffer when large (double
    # buffering buys nothing for a constant index_map and crowds v7x's 64 MiB).
    w_spec_kwargs = {}
    single_buffer_weights = (Hp * 3 * Hp * itm) >= (4 << 20)
    if single_buffer_weights:
        w_spec_kwargs["pipeline_mode"] = pl.Buffered(1)
    w_bufs = 1 if single_buffer_weights else 2

    # VMEM budget estimate; never drop below the 32 MiB default scoped limit.
    vmem_est = (2 * TT * BB * Hp * itm            # x block (double-buffered)
                + 2 * TT * BB * Hp * ito          # out block (double-buffered)
                + w_bufs * 2 * Hp * 3 * Hp * itm  # W_ih^T + W_hh^T
                + TT * BB * 3 * Hp * 4            # gi_s scratch (f32)
                + BB * Hp * 4                     # hidden carry
                + 2 * (3 * Hp + Hp) * 4)          # biases
    vmem_limit = max(32 << 20, int(vmem_est * 1.25) + (8 << 20))

    out_tm = pl.pallas_call(
        kernel,
        out_shape=jax.ShapeDtypeStruct((Tp, Bp, Hp), out_dtype),
        grid_spec=pltpu.PrefetchScalarGridSpec(
            num_scalar_prefetch=0,
            grid=(nb, nt),                                   # (batch chunks, time chunks)
            in_specs=[
                pl.BlockSpec((TT, BB, Hp), lambda b, t: (t, b, 0)),              # x chunk
                pl.BlockSpec((Hp, 3 * Hp), lambda b, t: (0, 0), **w_spec_kwargs),  # W_ih^T
                pl.BlockSpec((Hp, 3 * Hp), lambda b, t: (0, 0), **w_spec_kwargs),  # W_hh^T
                pl.BlockSpec((1, 3 * Hp), lambda b, t: (0, 0)),                  # b_ih + b_hh_rz
                pl.BlockSpec((1, Hp), lambda b, t: (0, 0)),                      # b_hh_n
            ],
            out_specs=pl.BlockSpec((TT, BB, Hp), lambda b, t: (t, b, 0)),
            scratch_shapes=[
                pltpu.VMEM((TT, BB, 3 * Hp), jnp.float32),   # hoisted gi
                pltpu.VMEM((BB, Hp), jnp.float32),           # hidden carry across chunks
            ],
        ),
        compiler_params=pltpu.CompilerParams(
            dimension_semantics=("parallel", "arbitrary"),   # batch parallel, time serial
            vmem_limit_bytes=vmem_limit,
        ),
    )(x, wih_p, whh_p, b_gi_p, b_hn_p)
    return out_tm


# -----------------------------------------------------------------------------
# Jitted forward glue (gather in time-major -> kernel -> slice/cast)
# -----------------------------------------------------------------------------
def _encoder_forward(token_ids, embedding, wih_p, whh_p, b_gi_p, b_hn_p, *,
                     hidden_size, time_block, max_batch_block,
                     matmul_dtype, out_dtype):
    B, T = token_ids.shape
    H = hidden_size
    # Gather directly in time-major layout: only the tiny (B,T) id matrix is
    # transposed, never the full (B,T,H) activation tensor.
    emb_tm = jnp.take(embedding, token_ids.T, axis=0)            # (T, B, H) f32
    # Dropout: module evaluated in inference mode => identity.
    # TODO(synk): training-mode dropout mask (pltpu.prng_random_bits) not applied.
    out_tm = gru_forward_pallas(
        emb_tm, wih_p, whh_p, b_gi_p, b_hn_p,
        hidden_size=H, time_block=time_block, max_batch_block=max_batch_block,
        matmul_dtype=matmul_dtype, out_dtype=out_dtype)
    output = jnp.transpose(out_tm[:T, :B, :H], (1, 0, 2)).astype(jnp.float32)
    # Single-layer GRU: final hidden == output at the last timestep (leading-dim slice).
    hidden = out_tm[T - 1, :B, :H].astype(jnp.float32)[None]     # (1, B, H)
    return output, hidden


# -----------------------------------------------------------------------------
# EncoderRNN wrapper (params pre-padded once; forward path jitted)
# -----------------------------------------------------------------------------
class EncoderRNNPallas:
    def __init__(self, input_size, hidden_size, num_gru_layers=1, dropout_p=0.01,
                 seed=0, time_block=32, max_batch_block=256,
                 matmul_dtype=jnp.bfloat16, out_dtype=jnp.bfloat16):
        assert num_gru_layers == 1, "kernel implements the single-layer GRU used by the module"
        self.hidden_size = hidden_size
        self.num_gru_layers = num_gru_layers
        self.dropout_p = dropout_p

        key = jax.random.PRNGKey(seed)
        k_emb, k_wih, k_whh, k_bih, k_bhh = jax.random.split(key, 5)
        bound = 1.0 / np.sqrt(hidden_size)
        H = hidden_size

        # nn.Embedding(input_size, hidden_size): N(0, 1) init
        self.embedding = jax.random.normal(k_emb, (input_size, H), jnp.float32)
        # nn.GRU weights (PyTorch gate order r,z,n), stored transposed for right-matmul
        self.w_ih_t = jax.random.uniform(k_wih, (H, 3 * H), jnp.float32, -bound, bound)
        self.w_hh_t = jax.random.uniform(k_whh, (H, 3 * H), jnp.float32, -bound, bound)
        self.b_ih = jax.random.uniform(k_bih, (1, 3 * H), jnp.float32, -bound, bound)
        self.b_hh = jax.random.uniform(k_bhh, (1, 3 * H), jnp.float32, -bound, bound)

        # ---- Pre-padded, gate-blocked kernel parameters (done ONCE, not per call) ----
        Hp = _round_up(H, 128)
        self.Hp = Hp
        self.wih_p = _pad_gate_matrix(self.w_ih_t, H, Hp, matmul_dtype)
        self.whh_p = _pad_gate_matrix(self.w_hh_t, H, Hp, matmul_dtype)
        # Fold b_ih + b_hh_{r,z} into one hoisted bias; keep b_hh_n separate.
        b_gi = self.b_ih.at[:, :2 * H].add(self.b_hh[:, :2 * H])
        self.b_gi_p = _pad_gate_bias_blocks(b_gi, H, Hp)
        self.b_hn_p = jnp.zeros((1, Hp), jnp.float32).at[0, :H].set(self.b_hh[0, 2 * H:])

        self._forward = jax.jit(functools.partial(
            _encoder_forward, hidden_size=H, time_block=time_block,
            max_batch_block=max_batch_block, matmul_dtype=matmul_dtype,
            out_dtype=out_dtype))

    def __call__(self, token_ids):
        """token_ids: int32 (B, T). Returns (output (B,T,H) f32, hidden (1,B,H) f32)."""
        return self._forward(token_ids, self.embedding, self.wih_p, self.whh_p,
                             self.b_gi_p, self.b_hn_p)


# -----------------------------------------------------------------------------
# Pure-JAX reference GRU (for correctness checks)
# -----------------------------------------------------------------------------
def gru_reference(embedded, w_ih_t, w_hh_t, b_ih, b_hh, cast_dtype=None):
    B, T, H = embedded.shape

    def mm(a, b):
        if cast_dtype is not None:
            a = a.astype(cast_dtype)
            b = b.astype(cast_dtype)
        return jnp.dot(a, b, preferred_element_type=jnp.float32)

    h0 = jnp.zeros((B, H), jnp.float32)

    def step(h, x_t):
        gi = mm(x_t, w_ih_t) + b_ih
        gh = mm(h, w_hh_t) + b_hh
        i_r, i_z, i_n = gi[:, :H], gi[:, H:2 * H], gi[:, 2 * H:]
        h_r, h_z, h_n = gh[:, :H], gh[:, H:2 * H], gh[:, 2 * H:]
        r = jax.nn.sigmoid(i_r + h_r)
        z = jax.nn.sigmoid(i_z + h_z)
        n = jnp.tanh(i_n + r * h_n)
        h_new = (1.0 - z) * n + z * h
        return h_new, h_new

    xs = jnp.transpose(embedded, (1, 0, 2))         # (T, B, H)
    h_last, outs = jax.lax.scan(step, h0, xs)
    return jnp.transpose(outs, (1, 0, 2)), h_last[None]


if __name__ == "__main__":
    VOCAB = 20      # input_size
    HIDDEN = 32     # hidden_size
    BATCH = 2
    SEQ = 8

    model = EncoderRNNPallas(VOCAB, HIDDEN, seed=0)

    key = jax.random.PRNGKey(0)
    token_ids = jax.random.randint(key, (BATCH, SEQ), 0, VOCAB, dtype=jnp.int32)

    output, hidden = model(token_ids)
    output = jax.block_until_ready(output)
    hidden = jax.block_until_ready(hidden)

    assert output.shape == (BATCH, SEQ, HIDDEN), output.shape
    assert hidden.shape == (1, BATCH, HIDDEN), hidden.shape

    embedded = jnp.take(model.embedding, token_ids, axis=0)

    # 1) Check against a bf16-matmul-matched JAX reference (verifies recurrence /
    #    padding / gate layout / bias-folding logic; tolerance covers the bf16
    #    output writeback).
    ref_out_b, ref_hid_b = gru_reference(
        embedded, model.w_ih_t, model.w_hh_t, model.b_ih, model.b_hh,
        cast_dtype=jnp.bfloat16)
    np.testing.assert_allclose(np.asarray(output), np.asarray(ref_out_b), rtol=2e-2, atol=2e-2)
    np.testing.assert_allclose(np.asarray(hidden), np.asarray(ref_hid_b), rtol=2e-2, atol=2e-2)

    # 2) Loose check against the exact f32 GRU (bounds the bf16 approximation).
    ref_out_f, ref_hid_f = gru_reference(
        embedded, model.w_ih_t, model.w_hh_t, model.b_ih, model.b_hh)
    np.testing.assert_allclose(np.asarray(output), np.asarray(ref_out_f), rtol=5e-2, atol=5e-2)
    np.testing.assert_allclose(np.asarray(hidden), np.asarray(ref_hid_f), rtol=5e-2, atol=5e-2)

    print("KERNEL_OK")
</pallas_src>

<mosaic_0001>
module attributes {stable_mosaic.version = 11 : i64} {
  func.func @gru_block_kernel(%arg0: i32, %arg1: i32, %arg2: memref<8x8x128xbf16, #tpu.memory_space<vmem>>, %arg3: memref<128x384xbf16, #tpu.memory_space<vmem>>, %arg4: memref<128x384xbf16, #tpu.memory_space<vmem>>, %arg5: memref<1x384xf32, #tpu.memory_space<vmem>>, %arg6: memref<1x128xf32, #tpu.memory_space<vmem>>, %arg7: memref<8x8x128xbf16, #tpu.memory_space<vmem>>, %arg8: memref<8x8x384xf32, #tpu.memory_space<vmem>>, %arg9: memref<8x128xf32, #tpu.memory_space<vmem>>) attributes {dimension_semantics = [#tpu.dimension_semantics<parallel>, #tpu.dimension_semantics<arbitrary>], iteration_bounds = array<i64: 1, 1>, scalar_prefetch = 0 : i64, scratch_operands = 2 : i64, tpu.core_type = #tpu.core_type<tc>, window_params = [{transform_indices = @transform_0, window_bounds = array<i64: 8, 8, 128>}, {pipeline_mode = #tpu.pipeline_mode<synchronous>, transform_indices = @transform_1, window_bounds = array<i64: 128, 384>}, {pipeline_mode = #tpu.pipeline_mode<synchronous>, transform_indices = @transform_2, window_bounds = array<i64: 128, 384>}, {pipeline_mode = #tpu.pipeline_mode<synchronous>, transform_indices = @transform_3, window_bounds = array<i64: 1, 384>}, {pipeline_mode = #tpu.pipeline_mode<synchronous>, transform_indices = @transform_4, window_bounds = array<i64: 1, 128>}, {transform_indices = @transform_5, window_bounds = array<i64: 8, 8, 128>}]} {
    %c0_i32 = arith.constant 0 : i32
    %0 = arith.cmpi eq, %arg1, %c0_i32 : i32
    %1 = arith.extui %0 : i1 to i32
    %c0_i32_0 = arith.constant 0 : i32
    %2 = arith.cmpi ne, %1, %c0_i32_0 : i32
    scf.if %2 {
      %cst_83 = arith.constant 0.000000e+00 : f32
      %314 = vector.broadcast %cst_83 : f32 to vector<8x128xf32>
      %c0_84 = arith.constant 0 : index
      %c0_85 = arith.constant 0 : index
      %315 = vector.load %arg9[%c0_84, %c0_85] : memref<8x128xf32, #tpu.memory_space<vmem>>, vector<8x128xf32>
      tpu.vector_store %arg9[%c0_84, %c0_85], %314 {strides = array<i32>} : memref<8x128xf32, #tpu.memory_space<vmem>>, vector<8x128xf32>,
    } else {
    }
    %c0 = arith.constant 0 : index
    %c0_1 = arith.constant 0 : index
    %c0_2 = arith.constant 0 : index
    %3 = vector.load %arg2[%c0, %c0_1, %c0_2] : memref<8x8x128xbf16, #tpu.memory_space<vmem>>, vector<8x8x128xbf16>
    %4 = vector.shape_cast %3 : vector<8x8x128xbf16> to vector<64x128xbf16>
    %c0_3 = arith.constant 0 : index
    %c0_4 = arith.constant 0 : index
    %5 = vector.load %arg3[%c0_3, %c0_4] : memref<128x384xbf16, #tpu.memory_space<vmem>>, vector<128x384xbf16>
    %cst = arith.constant dense<0.000000e+00> : vector<64x384xf32>
    %6 = tpu.matmul %4, %5, %cst {dimension_numbers = #tpu.dot_dimension_numbers<[1], [0], [0], [1], [0, 0, 1, 1], [], []>} : vector<64x128xbf16>, vector<128x384xbf16>, vector<64x384xf32> -> vector<64x384xf32>
    %c0_5 = arith.constant 0 : index
    %c0_6 = arith.constant 0 : index
    %7 = vector.load %arg5[%c0_5, %c0_6] : memref<1x384xf32, #tpu.memory_space<vmem>>, vector<1x384xf32>
    %8 = vector.broadcast %7 : vector<1x384xf32> to vector<64x384xf32>
    %9 = arith.addf %6, %8 : vector<64x384xf32>
    %10 = vector.shape_cast %9 : vector<64x384xf32> to vector<8x8x384xf32>
    %c0_7 = arith.constant 0 : index
    %c0_8 = arith.constant 0 : index
    %c0_9 = arith.constant 0 : index
    %11 = vector.load %arg8[%c0_7, %c0_8, %c0_9] : memref<8x8x384xf32, #tpu.memory_space<vmem>>, vector<8x8x384xf32>
    tpu.vector_store %arg8[%c0_7, %c0_8, %c0_9], %10 {strides = array<i32>} : memref<8x8x384xf32, #tpu.memory_space<vmem>>, vector<8x8x384xf32>,
    %c0_10 = arith.constant 0 : index
    %c0_11 = arith.constant 0 : index
    %12 = vector.load %arg4[%c0_10, %c0_11] : memref<128x384xbf16, #tpu.memory_space<vmem>>, vector<128x384xbf16>
    %c0_12 = arith.constant 0 : index
    %c0_13 = arith.constant 0 : index
    %13 = vector.load %arg6[%c0_12, %c0_13] : memref<1x128xf32, #tpu.memory_space<vmem>>, vector<1x128xf32>
    %14 = vector.shape_cast %13 : vector<1x128xf32> to vector<1x128xf32>
    %15 = vector.broadcast %14 : vector<1x128xf32> to vector<8x128xf32>
    %c0_14 = arith.constant 0 : index
    %c0_15 = arith.constant 0 : index
    %16 = vector.load %arg9[%c0_14, %c0_15] : memref<8x128xf32, #tpu.memory_space<vmem>>, vector<8x128xf32>
    %c0_i32_16 = arith.constant 0 : i32
    %17 = arith.truncf %16 : vector<8x128xf32> to vector<8x128xbf16>
    %cst_17 = arith.constant dense<0.000000e+00> : vector<8x384xf32>
    %18 = tpu.matmul %17, %12, %cst_17 {dimension_numbers = #tpu.dot_dimension_numbers<[1], [0], [0], [1], [0, 0, 1, 1], [], []>} : vector<8x128xbf16>, vector<128x384xbf16>, vector<8x384xf32> -> vector<8x384xf32>
    %19 = arith.index_cast %c0_i32_16 : i32 to index
    %c0_18 = arith.constant 0 : index
    %c0_19 = arith.constant 0 : index
    %20 = vector.load %arg8[%19, %c0_18, %c0_19] : memref<8x8x384xf32, #tpu.memory_space<vmem>>, vector<1x8x384xf32>
    %21 = vector.shape_cast %20 : vector<1x8x384xf32> to vector<8x384xf32>
    %22 = vector.extract_strided_slice %21 {offsets = [0, 0], sizes = [8, 128], strides = [1, 1]} : vector<8x384xf32> to vector<8x128xf32>
    %23 = vector.extract_strided_slice %18 {offsets = [0, 0], sizes = [8, 128], strides = [1, 1]} : vector<8x384xf32> to vector<8x128xf32>
    %24 = arith.addf %22, %23 : vector<8x128xf32>
    %25 = arith.negf %24 : vector<8x128xf32>
    %26 = math.exp %25 : vector<8x128xf32>
    %cst_20 = arith.constant 1.000000e+00 : f32
    %27 = vector.broadcast %cst_20 : f32 to vector<8x128xf32>
    %28 = arith.addf %27, %26 : vector<8x128xf32>
    %29 = arith.divf %27, %28 : vector<8x128xf32>
    %30 = vector.extract_strided_slice %21 {offsets = [0, 128], sizes = [8, 128], strides = [1, 1]} : vector<8x384xf32> to vector<8x128xf32>
    %31 = vector.extract_strided_slice %18 {offsets = [0, 128], sizes = [8, 128], strides = [1, 1]} : vector<8x384xf32> to vector<8x128xf32>
    %32 = arith.addf %30, %31 : vector<8x128xf32>
    %33 = arith.negf %32 : vector<8x128xf32>
    %34 = math.exp %33 : vector<8x128xf32>
    %cst_21 = arith.constant 1.000000e+00 : f32
    %35 = vector.broadcast %cst_21 : f32 to vector<8x128xf32>
    %36 = arith.addf %35, %34 : vector<8x128xf32>
    %37 = arith.divf %35, %36 : vector<8x128xf32>
    %38 = vector.extract_strided_slice %21 {offsets = [0, 256], sizes = [8, 128], strides = [1, 1]} : vector<8x384xf32> to vector<8x128xf32>
    %39 = vector.extract_strided_slice %18 {offsets = [0, 256], sizes = [8, 128], strides = [1, 1]} : vector<8x384xf32> to vector<8x128xf32>
    %40 = arith.addf %39, %15 : vector<8x128xf32>
    %41 = arith.mulf %29, %40 : vector<8x128xf32>
    %42 = arith.addf %38, %41 : vector<8x128xf32>
    %43 = math.tanh %42 : vector<8x128xf32>
    %cst_22 = arith.constant 1.000000e+00 : f32
    %44 = vector.broadcast %cst_22 : f32 to vector<8x128xf32>
    %45 = arith.subf %44, %37 : vector<8x128xf32>
    %46 = arith.mulf %45, %43 : vector<8x128xf32>
    %47 = arith.mulf %37, %16 : vector<8x128xf32>
    %48 = arith.addf %46, %47 : vector<8x128xf32>
    %49 = arith.truncf %48 : vector<8x128xf32> to vector<8x128xbf16>
    %50 = arith.index_cast %c0_i32_16 : i32 to index
    %c0_23 = arith.constant 0 : index
    %c0_24 = arith.constant 0 : index
    %51 = vector.load %arg7[%50, %c0_23, %c0_24] : memref<8x8x128xbf16, #tpu.memory_space<vmem>>, vector<1x8x128xbf16>
    %52 = vector.shape_cast %51 : vector<1x8x128xbf16> to vector<8x128xbf16>
    %53 = vector.shape_cast %49 : vector<8x128xbf16> to vector<1x8x128xbf16>
    tpu.vector_store %arg7[%50, %c0_23, %c0_24], %53 {strides = array<i32>} : memref<8x8x128xbf16, #tpu.memory_space<vmem>>, vector<1x8x128xbf16>,
    %c1_i32 = arith.constant 1 : i32
    %54 = arith.truncf %48 : vector<8x128xf32> to vector<8x128xbf16>
    %cst_25 = arith.constant dense<0.000000e+00> : vector<8x384xf32>
    %55 = tpu.matmul %54, %12, %cst_25 {dimension_numbers = #tpu.dot_dimension_numbers<[1], [0], [0], [1], [0, 0, 1, 1], [], []>} : vector<8x128xbf16>, vector<128x384xbf16>, vector<8x384xf32> -> vector<8x384xf32>
    %56 = arith.index_cast %c1_i32 : i32 to index
    %c0_26 = arith.constant 0 : index
    %c0_27 = arith.constant 0 : index
    %57 = vector.load %arg8[%56, %c0_26, %c0_27] : memref<8x8x384xf32, #tpu.memory_space<vmem>>, vector<1x8x384xf32>
    %58 = vector.shape_cast %57 : vector<1x8x384xf32> to vector<8x384xf32>
    %59 = vector.extract_strided_slice %58 {offsets = [0, 0], sizes = [8, 128], strides = [1, 1]} : vector<8x384xf32> to vector<8x128xf32>
    %60 = vector.extract_strided_slice %55 {offsets = [0, 0], sizes = [8, 128], strides = [1, 1]} : vector<8x384xf32> to vector<8x128xf32>
    %61 = arith.addf %59, %60 : vector<8x128xf32>
    %62 = arith.negf %61 : vector<8x128xf32>
    %63 = math.exp %62 : vector<8x128xf32>
    %cst_28 = arith.constant 1.000000e+00 : f32
    %64 = vector.broadcast %cst_28 : f32 to vector<8x128xf32>
    %65 = arith.addf %64, %63 : vector<8x128xf32>
    %66 = arith.divf %64, %65 : vector<8x128xf32>
    %67 = vector.extract_strided_slice %58 {offsets = [0, 128], sizes = [8, 128], strides = [1, 1]} : vector<8x384xf32> to vector<8x128xf32>
    %68 = vector.extract_strided_slice %55 {offsets = [0, 128], sizes = [8, 128], strides = [1, 1]} : vector<8x384xf32> to vector<8x128xf32>
    %69 = arith.addf %67, %68 : vector<8x128xf32>
    %70 = arith.negf %69 : vector<8x128xf32>
    %71 = math.exp %70 : vector<8x128xf32>
    %cst_29 = arith.constant 1.000000e+00 : f32
    %72 = vector.broadcast %cst_29 : f32 to vector<8x128xf32>
    %73 = arith.addf %72, %71 : vector<8x128xf32>
    %74 = arith.divf %72, %73 : vector<8x128xf32>
    %75 = vector.extract_strided_slice %58 {offsets = [0, 256], sizes = [8, 128], strides = [1, 1]} : vector<8x384xf32> to vector<8x128xf32>
    %76 = vector.extract_strided_slice %55 {offsets = [0, 256], sizes = [8, 128], strides = [1, 1]} : vector<8x384xf32> to vector<8x128xf32>
    %77 = arith.addf %76, %15 : vector<8x128xf32>
    %78 = arith.mulf %66, %77 : vector<8x128xf32>
    %79 = arith.addf %75, %78 : vector<8x128xf32>
    %80 = math.tanh %79 : vector<8x128xf32>
    %cst_30 = arith.constant 1.000000e+00 : f32
    %81 = vector.broadcast %cst_30 : f32 to vector<8x128xf32>
    %82 = arith.subf %81, %74 : vector<8x128xf32>
    %83 = arith.mulf %82, %80 : vector<8x128xf32>
    %84 = arith.mulf %74, %48 : vector<8x128xf32>
    %85 = arith.addf %83, %84 : vector<8x128xf32>
    %86 = arith.truncf %85 : vector<8x128xf32> to vector<8x128xbf16>
    %87 = arith.index_cast %c1_i32 : i32 to index
    %c0_31 = arith.constant 0 : index
    %c0_32 = arith.constant 0 : index
    %88 = vector.load %arg7[%87, %c0_31, %c0_32] : memref<8x8x128xbf16, #tpu.memory_space<vmem>>, vector<1x8x128xbf16>
    %89 = vector.shape_cast %88 : vector<1x8x128xbf16> to vector<8x128xbf16>
    %90 = vector.shape_cast %86 : vector<8x128xbf16> to vector<1x8x128xbf16>
    tpu.vector_store %arg7[%87, %c0_31, %c0_32], %90 {strides = array<i32>} : memref<8x8x128xbf16, #tpu.memory_space<vmem>>, vector<1x8x128xbf16>,
    %c2_i32 = arith.constant 2 : i32
    %91 = arith.truncf %85 : vector<8x128xf32> to vector<8x128xbf16>
    %cst_33 = arith.constant dense<0.000000e+00> : vector<8x384xf32>
    %92 = tpu.matmul %91, %12, %cst_33 {dimension_numbers = #tpu.dot_dimension_numbers<[1], [0], [0], [1], [0, 0, 1, 1], [], []>} : vector<8x128xbf16>, vector<128x384xbf16>, vector<8x384xf32> -> vector<8x384xf32>
    %93 = arith.index_cast %c2_i32 : i32 to index
    %c0_34 = arith.constant 0 : index
    %c0_35 = arith.constant 0 : index
    %94 = vector.load %arg8[%93, %c0_34, %c0_35] : memref<8x8x384xf32, #tpu.memory_space<vmem>>, vector<1x8x384xf32>
    %95 = vector.shape_cast %94 : vector<1x8x384xf32> to vector<8x384xf32>
    %96 = vector.extract_strided_slice %95 {offsets = [0, 0], sizes = [8, 128], strides = [1, 1]} : vector<8x384xf32> to vector<8x128xf32>
    %97 = vector.extract_strided_slice %92 {offsets = [0, 0], sizes = [8, 128], strides = [1, 1]} : vector<8x384xf32> to vector<8x128xf32>
    %98 = arith.addf %96, %97 : vector<8x128xf32>
    %99 = arith.negf %98 : vector<8x128xf32>
    %100 = math.exp %99 : vector<8x128xf32>
    %cst_36 = arith.constant 1.000000e+00 : f32
    %101 = vector.broadcast %cst_36 : f32 to vector<8x128xf32>
    %102 = arith.addf %101, %100 : vector<8x128xf32>
    %103 = arith.divf %101, %102 : vector<8x128xf32>
    %104 = vector.extract_strided_slice %95 {offsets = [0, 128], sizes = [8, 128], strides = [1, 1]} : vector<8x384xf32> to vector<8x128xf32>
    %105 = vector.extract_strided_slice %92 {offsets = [0, 128], sizes = [8, 128], strides = [1, 1]} : vector<8x384xf32> to vector<8x128xf32>
    %106 = arith.addf %104, %105 : vector<8x128xf32>
    %107 = arith.negf %106 : vector<8x128xf32>
    %108 = math.exp %107 : vector<8x128xf32>
    %cst_37 = arith.constant 1.000000e+00 : f32
    %109 = vector.broadcast %cst_37 : f32 to vector<8x128xf32>
    %110 = arith.addf %109, %108 : vector<8x128xf32>
    %111 = arith.divf %109, %110 : vector<8x128xf32>
    %112 = vector.extract_strided_slice %95 {offsets = [0, 256], sizes = [8, 128], strides = [1, 1]} : vector<8x384xf32> to vector<8x128xf32>
    %113 = vector.extract_strided_slice %92 {offsets = [0, 256], sizes = [8, 128], strides = [1, 1]} : vector<8x384xf32> to vector<8x128xf32>
    %114 = arith.addf %113, %15 : vector<8x128xf32>
    %115 = arith.mulf %103, %114 : vector<8x128xf32>
    %116 = arith.addf %112, %115 : vector<8x128xf32>
    %117 = math.tanh %116 : vector<8x128xf32>
    %cst_38 = arith.constant 1.000000e+00 : f32
    %118 = vector.broadcast %cst_38 : f32 to vector<8x128xf32>
    %119 = arith.subf %118, %111 : vector<8x128xf32>
    %120 = arith.mulf %119, %117 : vector<8x128xf32>
    %121 = arith.mulf %111, %85 : vector<8x128xf32>
    %122 = arith.addf %120, %121 : vector<8x128xf32>
    %123 = arith.truncf %122 : vector<8x128xf32> to vector<8x128xbf16>
    %124 = arith.index_cast %c2_i32 : i32 to index
    %c0_39 = arith.constant 0 : index
    %c0_40 = arith.constant 0 : index
    %125 = vector.load %arg7[%124, %c0_39, %c0_40] : memref<8x8x128xbf16, #tpu.memory_space<vmem>>, vector<1x8x128xbf16>
    %126 = vector.shape_cast %125 : vector<1x8x128xbf16> to vector<8x128xbf16>
    %127 = vector.shape_cast %123 : vector<8x128xbf16> to vector<1x8x128xbf16>
    tpu.vector_store %arg7[%124, %c0_39, %c0_40], %127 {strides = array<i32>} : memref<8x8x128xbf16, #tpu.memory_space<vmem>>, vector<1x8x128xbf16>,
    %c3_i32 = arith.constant 3 : i32
    %128 = arith.truncf %122 : vector<8x128xf32> to vector<8x128xbf16>
    %cst_41 = arith.constant dense<0.000000e+00> : vector<8x384xf32>
    %129 = tpu.matmul %128, %12, %cst_41 {dimension_numbers = #tpu.dot_dimension_numbers<[1], [0], [0], [1], [0, 0, 1, 1], [], []>} : vector<8x128xbf16>, vector<128x384xbf16>, vector<8x384xf32> -> vector<8x384xf32>
    %130 = arith.index_cast %c3_i32 : i32 to index
    %c0_42 = arith.constant 0 : index
    %c0_43 = arith.constant 0 : index
    %131 = vector.load %arg8[%130, %c0_42, %c0_43] : memref<8x8x384xf32, #tpu.memory_space<vmem>>, vector<1x8x384xf32>
    %132 = vector.shape_cast %131 : vector<1x8x384xf32> to vector<8x384xf32>
    %133 = vector.extract_strided_slice %132 {offsets = [0, 0], sizes = [8, 128], strides = [1, 1]} : vector<8x384xf32> to vector<8x128xf32>
    %134 = vector.extract_strided_slice %129 {offsets = [0, 0], sizes = [8, 128], strides = [1, 1]} : vector<8x384xf32> to vector<8x128xf32>
    %135 = arith.addf %133, %134 : vector<8x128xf32>
    %136 = arith.negf %135 : vector<8x128xf32>
    %137 = math.exp %136 : vector<8x128xf32>
    %cst_44 = arith.constant 1.000000e+00 : f32
    %138 = vector.broadcast %cst_44 : f32 to vector<8x128xf32>
    %139 = arith.addf %138, %137 : vector<8x128xf32>
    %140 = arith.divf %138, %139 : vector<8x128xf32>
    %141 = vector.extract_strided_slice %132 {offsets = [0, 128], sizes = [8, 128], strides = [1, 1]} : vector<8x384xf32> to vector<8x128xf32>
    %142 = vector.extract_strided_slice %129 {offsets = [0, 128], sizes = [8, 128], strides = [1, 1]} : vector<8x384xf32> to vector<8x128xf32>
    %143 = arith.addf %141, %142 : vector<8x128xf32>
    %144 = arith.negf %143 : vector<8x128xf32>
    %145 = math.exp %144 : vector<8x128xf32>
    %cst_45 = arith.constant 1.000000e+00 : f32
    %146 = vector.broadcast %cst_45 : f32 to vector<8x128xf32>
    %147 = arith.addf %146, %145 : vector<8x128xf32>
    %148 = arith.divf %146, %147 : vector<8x128xf32>
    %149 = vector.extract_strided_slice %132 {offsets = [0, 256], sizes = [8, 128], strides = [1, 1]} : vector<8x384xf32> to vector<8x128xf32>
    %150 = vector.extract_strided_slice %129 {offsets = [0, 256], sizes = [8, 128], strides = [1, 1]} : vector<8x384xf32> to vector<8x128xf32>
    %151 = arith.addf %150, %15 : vector<8x128xf32>
    %152 = arith.mulf %140, %151 : vector<8x128xf32>
    %153 = arith.addf %149, %152 : vector<8x128xf32>
    %154 = math.tanh %153 : vector<8x128xf32>
    %cst_46 = arith.constant 1.000000e+00 : f32
    %155 = vector.broadcast %cst_46 : f32 to vector<8x128xf32>
    %156 = arith.subf %155, %148 : vector<8x128xf32>
    %157 = arith.mulf %156, %154 : vector<8x128xf32>
    %158 = arith.mulf %148, %122 : vector<8x128xf32>
    %159 = arith.addf %157, %158 : vector<8x128xf32>
    %160 = arith.truncf %159 : vector<8x128xf32> to vector<8x128xbf16>
    %161 = arith.index_cast %c3_i32 : i32 to index
    %c0_47 = arith.constant 0 : index
    %c0_48 = arith.constant 0 : index
    %162 = vector.load %arg7[%161, %c0_47, %c0_48] : memref<8x8x128xbf16, #tpu.memory_space<vmem>>, vector<1x8x128xbf16>
    %163 = vector.shape_cast %162 : vector<1x8x128xbf16> to vector<8x128xbf16>
    %164 = vector.shape_cast %160 : vector<8x128xbf16> to vector<1x8x128xbf16>
    tpu.vector_store %arg7[%161, %c0_47, %c0_48], %164 {strides = array<i32>} : memref<8x8x128xbf16, #tpu.memory_space<vmem>>, vector<1x8x128xbf16>,
    %c4_i32 = arith.constant 4 : i32
    %165 = arith.truncf %159 : vector<8x128xf32> to vector<8x128xbf16>
    %cst_49 = arith.constant dense<0.000000e+00> : vector<8x384xf32>
    %166 = tpu.matmul %165, %12, %cst_49 {dimension_numbers = #tpu.dot_dimension_numbers<[1], [0], [0], [1], [0, 0, 1, 1], [], []>} : vector<8x128xbf16>, vector<128x384xbf16>, vector<8x384xf32> -> vector<8x384xf32>
    %167 = arith.index_cast %c4_i32 : i32 to index
    %c0_50 = arith.constant 0 : index
    %c0_51 = arith.constant 0 : index
    %168 = vector.load %arg8[%167, %c0_50, %c0_51] : memref<8x8x384xf32, #tpu.memory_space<vmem>>, vector<1x8x384xf32>
    %169 = vector.shape_cast %168 : vector<1x8x384xf32> to vector<8x384xf32>
    %170 = vector.extract_strided_slice %169 {offsets = [0, 0], sizes = [8, 128], strides = [1, 1]} : vector<8x384xf32> to vector<8x128xf32>
    %171 = vector.extract_strided_slice %166 {offsets = [0, 0], sizes = [8, 128], strides = [1, 1]} : vector<8x384xf32> to vector<8x128xf32>
    %172 = arith.addf %170, %171 : vector<8x128xf32>
    %173 = arith.negf %172 : vector<8x128xf32>
    %174 = math.exp %173 : vector<8x128xf32>
    %cst_52 = arith.constant 1.000000e+00 : f32
    %175 = vector.broadcast %cst_52 : f32 to vector<8x128xf32>
    %176 = arith.addf %175, %174 : vector<8x128xf32>
    %177 = arith.divf %175, %176 : vector<8x128xf32>
    %178 = vector.extract_strided_slice %169 {offsets = [0, 128], sizes = [8, 128], strides = [1, 1]} : vector<8x384xf32> to vector<8x128xf32>
    %179 = vector.extract_strided_slice %166 {offsets = [0, 128], sizes = [8, 128], strides = [1, 1]} : vector<8x384xf32> to vector<8x128xf32>
    %180 = arith.addf %178, %179 : vector<8x128xf32>
    %181 = arith.negf %180 : vector<8x128xf32>
    %182 = math.exp %181 : vector<8x128xf32>
    %cst_53 = arith.constant 1.000000e+00 : f32
    %183 = vector.broadcast %cst_53 : f32 to vector<8x128xf32>
    %184 = arith.addf %183, %182 : vector<8x128xf32>
    %185 = arith.divf %183, %184 : vector<8x128xf32>
    %186 = vector.extract_strided_slice %169 {offsets = [0, 256], sizes = [8, 128], strides = [1, 1]} : vector<8x384xf32> to vector<8x128xf32>
    %187 = vector.extract_strided_slice %166 {offsets = [0, 256], sizes = [8, 128], strides = [1, 1]} : vector<8x384xf32> to vector<8x128xf32>
    %188 = arith.addf %187, %15 : vector<8x128xf32>
    %189 = arith.mulf %177, %188 : vector<8x128xf32>
    %190 = arith.addf %186, %189 : vector<8x128xf32>
    %191 = math.tanh %190 : vector<8x128xf32>
    %cst_54 = arith.constant 1.000000e+00 : f32
    %192 = vector.broadcast %cst_54 : f32 to vector<8x128xf32>
    %193 = arith.subf %192, %185 : vector<8x128xf32>
    %194 = arith.mulf %193, %191 : vector<8x128xf32>
    %195 = arith.mulf %185, %159 : vector<8x128xf32>
    %196 = arith.addf %194, %195 : vector<8x128xf32>
    %197 = arith.truncf %196 : vector<8x128xf32> to vector<8x128xbf16>
    %198 = arith.index_cast %c4_i32 : i32 to index
    %c0_55 = arith.constant 0 : index
    %c0_56 = arith.constant 0 : index
    %199 = vector.load %arg7[%198, %c0_55, %c0_56] : memref<8x8x128xbf16, #tpu.memory_space<vmem>>, vector<1x8x128xbf16>
    %200 = vector.shape_cast %199 : vector<1x8x128xbf16> to vector<8x128xbf16>
    %201 = vector.shape_cast %197 : vector<8x128xbf16> to vector<1x8x128xbf16>
    tpu.vector_store %arg7[%198, %c0_55, %c0_56], %201 {strides = array<i32>} : memref<8x8x128xbf16, #tpu.memory_space<vmem>>, vector<1x8x128xbf16>,
    %c5_i32 = arith.constant 5 : i32
    %202 = arith.truncf %196 : vector<8x128xf32> to vector<8x128xbf16>
    %cst_57 = arith.constant dense<0.000000e+00> : vector<8x384xf32>
    %203 = tpu.matmul %202, %12, %cst_57 {dimension_numbers = #tpu.dot_dimension_numbers<[1], [0], [0], [1], [0, 0, 1, 1], [], []>} : vector<8x128xbf16>, vector<128x384xbf16>, vector<8x384xf32> -> vector<8x384xf32>
    %204 = arith.index_cast %c5_i32 : i32 to index
    %c0_58 = arith.constant 0 : index
    %c0_59 = arith.constant 0 : index
    %205 = vector.load %arg8[%204, %c0_58, %c0_59] : memref<8x8x384xf32, #tpu.memory_space<vmem>>, vector<1x8x384xf32>
    %206 = vector.shape_cast %205 : vector<1x8x384xf32> to vector<8x384xf32>
    %207 = vector.extract_strided_slice %206 {offsets = [0, 0], sizes = [8, 128], strides = [1, 1]} : vector<8x384xf32> to vector<8x128xf32>
    %208 = vector.extract_strided_slice %203 {offsets = [0, 0], sizes = [8, 128], strides = [1, 1]} : vector<8x384xf32> to vector<8x128xf32>
    %209 = arith.addf %207, %208 : vector<8x128xf32>
    %210 = arith.negf %209 : vector<8x128xf32>
    %211 = math.exp %210 : vector<8x128xf32>
    %cst_60 = arith.constant 1.000000e+00 : f32
    %212 = vector.broadcast %cst_60 : f32 to vector<8x128xf32>
    %213 = arith.addf %212, %211 : vector<8x128xf32>
    %214 = arith.divf %212, %213 : vector<8x128xf32>
    %215 = vector.extract_strided_slice %206 {offsets = [0, 128], sizes = [8, 128], strides = [1, 1]} : vector<8x384xf32> to vector<8x128xf32>
    %216 = vector.extract_strided_slice %203 {offsets = [0, 128], sizes = [8, 128], strides = [1, 1]} : vector<8x384xf32> to vector<8x128xf32>
    %217 = arith.addf %215, %216 : vector<8x128xf32>
    %218 = arith.negf %217 : vector<8x128xf32>
    %219 = math.exp %218 : vector<8x128xf32>
    %cst_61 = arith.constant 1.000000e+00 : f32
    %220 = vector.broadcast %cst_61 : f32 to vector<8x128xf32>
    %221 = arith.addf %220, %219 : vector<8x128xf32>
    %222 = arith.divf %220, %221 : vector<8x128xf32>
    %223 = vector.extract_strided_slice %206 {offsets = [0, 256], sizes = [8, 128], strides = [1, 1]} : vector<8x384xf32> to vector<8x128xf32>
    %224 = vector.extract_strided_slice %203 {offsets = [0, 256], sizes = [8, 128], strides = [1, 1]} : vector<8x384xf32> to vector<8x128xf32>
    %225 = arith.addf %224, %15 : vector<8x128xf32>
    %226 = arith.mulf %214, %225 : vector<8x128xf32>
    %227 = arith.addf %223, %226 : vector<8x128xf32>
    %228 = math.tanh %227 : vector<8x128xf32>
    %cst_62 = arith.constant 1.000000e+00 : f32
    %229 = vector.broadcast %cst_62 : f32 to vector<8x128xf32>
    %230 = arith.subf %229, %222 : vector<8x128xf32>
    %231 = arith.mulf %230, %228 : vector<8x128xf32>
    %232 = arith.mulf %222, %196 : vector<8x128xf32>
    %233 = arith.addf %231, %232 : vector<8x128xf32>
    %234 = arith.truncf %233 : vector<8x128xf32> to vector<8x128xbf16>
    %235 = arith.index_cast %c5_i32 : i32 to index
    %c0_63 = arith.constant 0 : index
    %c0_64 = arith.constant 0 : index
    %236 = vector.load %arg7[%235, %c0_63, %c0_64] : memref<8x8x128xbf16, #tpu.memory_space<vmem>>, vector<1x8x128xbf16>
    %237 = vector.shape_cast %236 : vector<1x8x128xbf16> to vector<8x128xbf16>
    %238 = vector.shape_cast %234 : vector<8x128xbf16> to vector<1x8x128xbf16>
    tpu.vector_store %arg7[%235, %c0_63, %c0_64], %238 {strides = array<i32>} : memref<8x8x128xbf16, #tpu.memory_space<vmem>>, vector<1x8x128xbf16>,
    %c6_i32 = arith.constant 6 : i32
    %239 = arith.truncf %233 : vector<8x128xf32> to vector<8x128xbf16>
    %cst_65 = arith.constant dense<0.000000e+00> : vector<8x384xf32>
    %240 = tpu.matmul %239, %12, %cst_65 {dimension_numbers = #tpu.dot_dimension_numbers<[1], [0], [0], [1], [0, 0, 1, 1], [], []>} : vector<8x128xbf16>, vector<128x384xbf16>, vector<8x384xf32> -> vector<8x384xf32>
    %241 = arith.index_cast %c6_i32 : i32 to index
    %c0_66 = arith.constant 0 : index
    %c0_67 = arith.constant 0 : index
    %242 = vector.load %arg8[%241, %c0_66, %c0_67] : memref<8x8x384xf32, #tpu.memory_space<vmem>>, vector<1x8x384xf32>
    %243 = vector.shape_cast %242 : vector<1x8x384xf32> to vector<8x384xf32>
    %244 = vector.extract_strided_slice %243 {offsets = [0, 0], sizes = [8, 128], strides = [1, 1]} : vector<8x384xf32> to vector<8x128xf32>
    %245 = vector.extract_strided_slice %240 {offsets = [0, 0], sizes = [8, 128], strides = [1, 1]} : vector<8x384xf32> to vector<8x128xf32>
    %246 = arith.addf %244, %245 : vector<8x128xf32>
    %247 = arith.negf %246 : vector<8x128xf32>
    %248 = math.exp %247 : vector<8x128xf32>
    %cst_68 = arith.constant 1.000000e+00 : f32
    %249 = vector.broadcast %cst_68 : f32 to vector<8x128xf32>
    %250 = arith.addf %249, %248 : vector<8x128xf32>
    %251 = arith.divf %249, %250 : vector<8x128xf32>
    %252 = vector.extract_strided_slice %243 {offsets = [0, 128], sizes = [8, 128], strides = [1, 1]} : vector<8x384xf32> to vector<8x128xf32>
    %253 = vector.extract_strided_slice %240 {offsets = [0, 128], sizes = [8, 128], strides = [1, 1]} : vector<8x384xf32> to vector<8x128xf32>
    %254 = arith.addf %252, %253 : vector<8x128xf32>
    %255 = arith.negf %254 : vector<8x128xf32>
    %256 = math.exp %255 : vector<8x128xf32>
    %cst_69 = arith.constant 1.000000e+00 : f32
    %257 = vector.broadcast %cst_69 : f32 to vector<8x128xf32>
    %258 = arith.addf %257, %256 : vector<8x128xf32>
    %259 = arith.divf %257, %258 : vector<8x128xf32>
    %260 = vector.extract_strided_slice %243 {offsets = [0, 256], sizes = [8, 128], strides = [1, 1]} : vector<8x384xf32> to vector<8x128xf32>
    %261 = vector.extract_strided_slice %240 {offsets = [0, 256], sizes = [8, 128], strides = [1, 1]} : vector<8x384xf32> to vector<8x128xf32>
    %262 = arith.addf %261, %15 : vector<8x128xf32>
    %263 = arith.mulf %251, %262 : vector<8x128xf32>
    %264 = arith.addf %260, %263 : vector<8x128xf32>
    %265 = math.tanh %264 : vector<8x128xf32>
    %cst_70 = arith.constant 1.000000e+00 : f32
    %266 = vector.broadcast %cst_70 : f32 to vector<8x128xf32>
    %267 = arith.subf %266, %259 : vector<8x128xf32>
    %268 = arith.mulf %267, %265 : vector<8x128xf32>
    %269 = arith.mulf %259, %233 : vector<8x128xf32>
    %270 = arith.addf %268, %269 : vector<8x128xf32>
    %271 = arith.truncf %270 : vector<8x128xf32> to vector<8x128xbf16>
    %272 = arith.index_cast %c6_i32 : i32 to index
    %c0_71 = arith.constant 0 : index
    %c0_72 = arith.constant 0 : index
    %273 = vector.load %arg7[%272, %c0_71, %c0_72] : memref<8x8x128xbf16, #tpu.memory_space<vmem>>, vector<1x8x128xbf16>
    %274 = vector.shape_cast %273 : vector<1x8x128xbf16> to vector<8x128xbf16>
    %275 = vector.shape_cast %271 : vector<8x128xbf16> to vector<1x8x128xbf16>
    tpu.vector_store %arg7[%272, %c0_71, %c0_72], %275 {strides = array<i32>} : memref<8x8x128xbf16, #tpu.memory_space<vmem>>, vector<1x8x128xbf16>,
    %c7_i32 = arith.constant 7 : i32
    %276 = arith.truncf %270 : vector<8x128xf32> to vector<8x128xbf16>
    %cst_73 = arith.constant dense<0.000000e+00> : vector<8x384xf32>
    %277 = tpu.matmul %276, %12, %cst_73 {dimension_numbers = #tpu.dot_dimension_numbers<[1], [0], [0], [1], [0, 0, 1, 1], [], []>} : vector<8x128xbf16>, vector<128x384xbf16>, vector<8x384xf32> -> vector<8x384xf32>
    %278 = arith.index_cast %c7_i32 : i32 to index
    %c0_74 = arith.constant 0 : index
    %c0_75 = arith.constant 0 : index
    %279 = vector.load %arg8[%278, %c0_74, %c0_75] : memref<8x8x384xf32, #tpu.memory_space<vmem>>, vector<1x8x384xf32>
    %280 = vector.shape_cast %279 : vector<1x8x384xf32> to vector<8x384xf32>
    %281 = vector.extract_strided_slice %280 {offsets = [0, 0], sizes = [8, 128], strides = [1, 1]} : vector<8x384xf32> to vector<8x128xf32>
    %282 = vector.extract_strided_slice %277 {offsets = [0, 0], sizes = [8, 128], strides = [1, 1]} : vector<8x384xf32> to vector<8x128xf32>
    %283 = arith.addf %281, %282 : vector<8x128xf32>
    %284 = arith.negf %283 : vector<8x128xf32>
    %285 = math.exp %284 : vector<8x128xf32>
    %cst_76 = arith.constant 1.000000e+00 : f32
    %286 = vector.broadcast %cst_76 : f32 to vector<8x128xf32>
    %287 = arith.addf %286, %285 : vector<8x128xf32>
    %288 = arith.divf %286, %287 : vector<8x128xf32>
    %289 = vector.extract_strided_slice %280 {offsets = [0, 128], sizes = [8, 128], strides = [1, 1]} : vector<8x384xf32> to vector<8x128xf32>
    %290 = vector.extract_strided_slice %277 {offsets = [0, 128], sizes = [8, 128], strides = [1, 1]} : vector<8x384xf32> to vector<8x128xf32>
    %291 = arith.addf %289, %290 : vector<8x128xf32>
    %292 = arith.negf %291 : vector<8x128xf32>
    %293 = math.exp %292 : vector<8x128xf32>
    %cst_77 = arith.constant 1.000000e+00 : f32
    %294 = vector.broadcast %cst_77 : f32 to vector<8x128xf32>
    %295 = arith.addf %294, %293 : vector<8x128xf32>
    %296 = arith.divf %294, %295 : vector<8x128xf32>
    %297 = vector.extract_strided_slice %280 {offsets = [0, 256], sizes = [8, 128], strides = [1, 1]} : vector<8x384xf32> to vector<8x128xf32>
    %298 = vector.extract_strided_slice %277 {offsets = [0, 256], sizes = [8, 128], strides = [1, 1]} : vector<8x384xf32> to vector<8x128xf32>
    %299 = arith.addf %298, %15 : vector<8x128xf32>
    %300 = arith.mulf %288, %299 : vector<8x128xf32>
    %301 = arith.addf %297, %300 : vector<8x128xf32>
    %302 = math.tanh %301 : vector<8x128xf32>
    %cst_78 = arith.constant 1.000000e+00 : f32
    %303 = vector.broadcast %cst_78 : f32 to vector<8x128xf32>
    %304 = arith.subf %303, %296 : vector<8x128xf32>
    %305 = arith.mulf %304, %302 : vector<8x128xf32>
    %306 = arith.mulf %296, %270 : vector<8x128xf32>
    %307 = arith.addf %305, %306 : vector<8x128xf32>
    %308 = arith.truncf %307 : vector<8x128xf32> to vector<8x128xbf16>
    %309 = arith.index_cast %c7_i32 : i32 to index
    %c0_79 = arith.constant 0 : index
    %c0_80 = arith.constant 0 : index
    %310 = vector.load %arg7[%309, %c0_79, %c0_80] : memref<8x8x128xbf16, #tpu.memory_space<vmem>>, vector<1x8x128xbf16>
    %311 = vector.shape_cast %310 : vector<1x8x128xbf16> to vector<8x128xbf16>
    %312 = vector.shape_cast %308 : vector<8x128xbf16> to vector<1x8x128xbf16>
    tpu.vector_store %arg7[%309, %c0_79, %c0_80], %312 {strides = array<i32>} : memref<8x8x128xbf16, #tpu.memory_space<vmem>>, vector<1x8x128xbf16>,
    %c8_i32 = arith.constant 8 : i32
    %c0_81 = arith.constant 0 : index
    %c0_82 = arith.constant 0 : index
    %313 = vector.load %arg9[%c0_81, %c0_82] : memref<8x128xf32, #tpu.memory_space<vmem>>, vector<8x128xf32>
    tpu.vector_store %arg9[%c0_81, %c0_82], %307 {strides = array<i32>} : memref<8x128xf32, #tpu.memory_space<vmem>>, vector<8x128xf32>,
    return
  }
  func.func @transform_0(%arg0: i32, %arg1: i32) -> (i32, i32, i32) {
    %c0_i32 = arith.constant 0 : i32
    %c0_i32_0 = arith.constant 0 : i32
    return %arg1, %arg0, %c0_i32 : i32, i32, i32
  }
  func.func @transform_1(%arg0: i32, %arg1: i32) -> (i32, i32) {
    %c0_i32 = arith.constant 0 : i32
    %c0_i32_0 = arith.constant 0 : i32
    %c0_i32_1 = arith.constant 0 : i32
    return %c0_i32, %c0_i32_0 : i32, i32
  }
  func.func @transform_2(%arg0: i32, %arg1: i32) -> (i32, i32) {
    %c0_i32 = arith.constant 0 : i32
    %c0_i32_0 = arith.constant 0 : i32
    %c0_i32_1 = arith.constant 0 : i32
    return %c0_i32, %c0_i32_0 : i32, i32
  }
  func.func @transform_3(%arg0: i32, %arg1: i32) -> (i32, i32) {
    %c0_i32 = arith.constant 0 : i32
    %c0_i32_0 = arith.constant 0 : i32
    %c0_i32_1 = arith.constant 0 : i32
    return %c0_i32, %c0_i32_0 : i32, i32
  }
  func.func @transform_4(%arg0: i32, %arg1: i32) -> (i32, i32) {
    %c0_i32 = arith.constant 0 : i32
    %c0_i32_0 = arith.constant 0 : i32
    %c0_i32_1 = arith.constant 0 : i32
    return %c0_i32, %c0_i32_0 : i32, i32
  }
  func.func @transform_5(%arg0: i32, %arg1: i32) -> (i32, i32, i32) {
    %c0_i32 = arith.constant 0 : i32
    %c0_i32_0 = arith.constant 0 : i32
    return %arg1, %arg0, %c0_i32 : i32, i32, i32
  }
}

</mosaic_0001>

<llo_original>
// kernel: _encoder_forward.1
$region0: #{_encoder_forward.1}
  #allocation0 [shape = 'u32[]', space=smem, size = 0x4, offset = 0x4, fixed_abs, tag = 'smem constant byte address 0x4 - core index']
  #allocation1 [shape = 'u32[144,128]{1,0:T(1,128)}', space=vmem, size = 0x12000, scoped, tag = 'internal scratch']
  #allocation2 [shape = 'f32[8,8,384]{2,1,0:T(8,128)}', space=vmem, size = 0x18000, scoped, tag = 'scratch operand']
  #allocation3 [shape = 'f32[8,128]{1,0:T(8,128)}', space=vmem, size = 0x1000, scoped, tag = 'scratch operand']
  %s0 = inlined_call_operand.vmem [shape: bf16[8,8,128], index: 0, kind: input, shape index: {}]
  %s1 = inlined_call_operand.hbm [shape: bf16[128,384], index: 1, kind: input, shape index: {}]
  %s2 = inlined_call_operand.hbm [shape: bf16[128,384], index: 2, kind: input, shape index: {}]
  %s3 = inlined_call_operand.vmem [shape: f32[1,384], index: 3, kind: input, shape index: {}]
  %s4 = inlined_call_operand.vmem [shape: f32[1,128], index: 4, kind: input, shape index: {}]
  %s5 = inlined_call_operand.vmem [shape: bf16[8,8,128], index: 5, kind: output, shape index: {}]
  %s6 = sld [smem:[#allocation0]]
  $region42: #{_encoder_forward.1} parent=0
    _
  %s8 = ssub.s32 1, %s6
  %s9 = scalar_select 0, %s8, %s6
  $region1: #{_encoder_forward.1} parent=0
    #allocation4 [shape = 'u8[98304]{0}', space=vmem, size = 0x18000, scoped, tag = 'input window, operand 1, single buffered']
    #allocation5 [shape = 's32[1]{0}', space=sflag, size = 0x4, scoped, tag = 'scoped memory for _encoder_forward.1']
    #allocation6 [shape = 'u8[98304]{0}', space=vmem, size = 0x18000, scoped, tag = 'input window, operand 2, single buffered']
    #allocation7 [shape = 's32[1]{0}', space=sflag, size = 0x4, scoped, tag = 'scoped memory for _encoder_forward.1']
    %10 = vsyncpa [#allocation5], 0
    %11 = vsyncpa [#allocation7], 0
    // Predicated region
    $region2: #{_encoder_forward.1} parent=1 // pred_check
      _
    $region3: #{_encoder_forward.1} parent=1 // pred_check_branch
      %13 = sbr.rel (0) target = $region5
    $region4: #{_encoder_forward.1} parent=1 // pred_region
      _
    $region5: #{_encoder_forward.1} parent=1 // pred_fallthru
      _
    // Predicated region
    $region6: #{_encoder_forward.1} parent=1 // pred_check
      _
    $region7: #{_encoder_forward.1} parent=1 // pred_check_branch
      %15 = sbr.rel (0) target = $region9
    $region8: #{_encoder_forward.1} parent=1 // pred_region
      %s17 = ssub.s32 3072, 3072
      %18 = vsyncadd [#allocation5], %s17
      %s19 = sshll.u32 [#allocation4], 4
      %s20 = int_to_ptr.vmem [resolvable:$true] %s19
      %25 = dma.hbm_to_vmem [thread:$0]  %s1, 3072, %s20, [#allocation5], 192, 192, 12
    $region9: #{_encoder_forward.1} parent=1 // pred_fallthru
      _
    // Predicated region
    $region10: #{_encoder_forward.1} parent=1 // pred_check
      _
    $region11: #{_encoder_forward.1} parent=1 // pred_check_branch
      %27 = sbr.rel (0) target = $region13
    $region12: #{_encoder_forward.1} parent=1 // pred_region
      %s29 = ssub.s32 3072, 3072
      %30 = vsyncadd [#allocation7], %s29
      %s31 = sshll.u32 [#allocation6], 4
      %s32 = int_to_ptr.vmem [resolvable:$true] %s31
      %37 = dma.hbm_to_vmem [thread:$0]  %s2, 3072, %s32, [#allocation7], 192, 192, 12
    $region13: #{_encoder_forward.1} parent=1 // pred_fallthru
      _
    // Predicated region
    $region14: #{_encoder_forward.1} parent=1 // pred_check
      _
    $region15: #{_encoder_forward.1} parent=1 // pred_check_branch
      %39 = sbr.rel (0) target = $region17
    $region16: #{_encoder_forward.1} parent=1 // pred_region
      _
    $region17: #{_encoder_forward.1} parent=1 // pred_fallthru
      _
    // Predicated region
    $region18: #{_encoder_forward.1} parent=1 // pred_check
      _
    $region19: #{_encoder_forward.1} parent=1 // pred_check_branch
      %41 = sbr.rel (0) target = $region21
    $region20: #{_encoder_forward.1} parent=1 // pred_region
      _
    $region21: #{_encoder_forward.1} parent=1 // pred_fallthru
      _
    // Predicated region
    $region22: #{_encoder_forward.1} parent=1 // pred_check
      _
    $region23: #{_encoder_forward.1} parent=1 // pred_check_branch
      %43 = sbr.rel (0) target = $region25
    $region24: #{_encoder_forward.1} parent=1 // pred_region
      %44 = dma.done [#allocation5], 3072
    $region25: #{_encoder_forward.1} parent=1 // pred_fallthru
      _
    // Predicated region
    $region26: #{_encoder_forward.1} parent=1 // pred_check
      _
    $region27: #{_encoder_forward.1} parent=1 // pred_check_branch
      %46 = sbr.rel (0) target = $region29
    $region28: #{_encoder_forward.1} parent=1 // pred_region
      %47 = dma.done [#allocation7], 3072
    $region29: #{_encoder_forward.1} parent=1 // pred_fallthru
      _
    %p49 = scmp.eq.s32.totalorder 0, 0
    // Predicated region
    $region30: #{_encoder_forward.1} parent=1 // pred_check
      %p50 = pneg %p49
    $region31: #{_encoder_forward.1} parent=1 // pred_check_branch
      %52 = sbr.rel (%p50) target = $region33
    $region32: #{_encoder_forward.1} parent=1 // pred_region
      %53 = vst [vmem:[#allocation3] sm:$0xff] 0.0
    $region33: #{_encoder_forward.1} parent=1 // pred_fallthru
      _
    %v54 = vld [vmem:[%s0] sm:$0xf]
    %v55 = vld [vmem:[%s0 + $0x4] sm:$0xf]
    %v56 = vld [vmem:[%s0 + $0x8] sm:$0xf]
    %v57 = vld [vmem:[%s0 + $0xc] sm:$0xf]
    %v58 = vld [vmem:[%s0 + $0x10] sm:$0xf]
    %v59 = vld [vmem:[%s0 + $0x14] sm:$0xf]
    %v60 = vld [vmem:[%s0 + $0x18] sm:$0xf]
    %v61 = vld [vmem:[%s0 + $0x1c] sm:$0xf]
    %v62 = vld [vmem:[#allocation4] sm:$0xff]
    %v63 = vld [vmem:[#allocation4 + $0x8] sm:$0xf]
    %v64 = vld [vmem:[#allocation4 + $0xc] sm:$0xff]
    %v65 = vld [vmem:[#allocation4 + $0x14] sm:$0xf]
    %v66 = vld [vmem:[#allocation4 + $0x18] sm:$0xff]
    %v67 = vld [vmem:[#allocation4 + $0x20] sm:$0xf]
    %v68 = vld [vmem:[#allocation4 + $0x24] sm:$0xff]
    %v69 = vld [vmem:[#allocation4 + $0x2c] sm:$0xf]
    %v70 = vld [vmem:[#allocation4 + $0x30] sm:$0xff]
    %v71 = vld [vmem:[#allocation4 + $0x38] sm:$0xf]
    %v72 = vld [vmem:[#allocation4 + $0x3c] sm:$0xff]
    %v73 = vld [vmem:[#allocation4 + $0x44] sm:$0xf]
    %v74 = vld [vmem:[#allocation4 + $0x48] sm:$0xff]
    %v75 = vld [vmem:[#allocation4 + $0x50] sm:$0xf]
    %v76 = vld [vmem:[#allocation4 + $0x54] sm:$0xff]
    %v77 = vld [vmem:[#allocation4 + $0x5c] sm:$0xf]
    %v78 = vld [vmem:[#allocation4 + $0x60] sm:$0xff]
    %v79 = vld [vmem:[#allocation4 + $0x68] sm:$0xf]
    %v80 = vld [vmem:[#allocation4 + $0x6c] sm:$0xff]
    %v81 = vld [vmem:[#allocation4 + $0x74] sm:$0xf]
    %v82 = vld [vmem:[#allocation4 + $0x78] sm:$0xff]
    %v83 = vld [vmem:[#allocation4 + $0x80] sm:$0xf]
    %v84 = vld [vmem:[#allocation4 + $0x84] sm:$0xff]
    %v85 = vld [vmem:[#allocation4 + $0x8c] sm:$0xf]
    %v86 = vld [vmem:[#allocation4 + $0x90] sm:$0xff]
    %v87 = vld [vmem:[#allocation4 + $0x98] sm:$0xf]
    %v88 = vld [vmem:[#allocation4 + $0x9c] sm:$0xff]
    %v89 = vld [vmem:[#allocation4 + $0xa4] sm:$0xf]
    %v90 = vld [vmem:[#allocation4 + $0xa8] sm:$0xff]
    %v91 = vld [vmem:[#allocation4 + $0xb0] sm:$0xf]
    %v92 = vld [vmem:[#allocation4 + $0xb4] sm:$0xff]
    %v93 = vld [vmem:[#allocation4 + $0xbc] sm:$0xf]
    %v94 = vld [vmem:[%s3] sm:$0x7]
    %v96 = vlaneseq
    %v97 = vshrl.u32 %v96, 7
    %v98 = vsub.s32 0, %v97
    %v99 = vrot.slane %v94, %v98
    %v100 = vlaneseq
    %v101 = vshrl.u32 %v100, 7
    %v102 = vsub.s32 1, %v101
    %v103 = vrot.slane %v94, %v102
    %v104 = vlaneseq
    %v105 = vshrl.u32 %v104, 7
    %v106 = vsub.s32 2, %v105
    %v107 = vrot.slane %v94, %v106
    %v119 = vunpack.c.l.b16 %v54
    %v120 = vunpack.c.l.b16 %v55
    %v121 = vunpack.c.l.b16 %v56
    %v122 = vunpack.c.l.b16 %v57
    %v123 = vunpack.c.l.b16 %v58
    %v124 = vunpack.c.l.b16 %v59
    %v125 = vunpack.c.l.b16 %v60
    %v126 = vunpack.c.l.b16 %v61
    %v127 = vpack.c.b16 %v120, %v119
    %v128 = vpack.c.b16 %v122, %v121
    %v129 = vpack.c.b16 %v124, %v123
    %v130 = vpack.c.b16 %v126, %v125
    %v167 = vunpack.c.l.b16 %v62
    %v168 = vunpack.c.h.b16 %v62
    %v169 = vunpack.c.l.b16 %v63
    %v170 = vunpack.c.l.b16 %v64
    %v171 = vunpack.c.h.b16 %v64
    %v172 = vunpack.c.l.b16 %v65
    %v173 = vunpack.c.l.b16 %v66
    %v174 = vunpack.c.h.b16 %v66
    %v175 = vunpack.c.l.b16 %v67
    %v176 = vunpack.c.l.b16 %v68
    %v177 = vunpack.c.h.b16 %v68
    %v178 = vunpack.c.l.b16 %v69
    %v179 = vunpack.c.l.b16 %v70
    %v180 = vunpack.c.h.b16 %v70
    %v181 = vunpack.c.l.b16 %v71
    %v182 = vunpack.c.l.b16 %v72
    %v183 = vunpack.c.h.b16 %v72
    %v184 = vunpack.c.l.b16 %v73
    %v185 = vunpack.c.l.b16 %v74
    %v186 = vunpack.c.h.b16 %v74
    %v187 = vunpack.c.l.b16 %v75
    %v188 = vunpack.c.l.b16 %v76
    %v189 = vunpack.c.h.b16 %v76
    %v190 = vunpack.c.l.b16 %v77
    %v191 = vunpack.c.l.b16 %v78
    %v192 = vunpack.c.h.b16 %v78
    %v193 = vunpack.c.l.b16 %v79
    %v194 = vunpack.c.l.b16 %v80
    %v195 = vunpack.c.h.b16 %v80
    %v196 = vunpack.c.l.b16 %v81
    %v197 = vunpack.c.l.b16 %v82
    %v198 = vunpack.c.h.b16 %v82
    %v199 = vunpack.c.l.b16 %v83
    %v200 = vunpack.c.l.b16 %v84
    %v201 = vunpack.c.h.b16 %v84
    %v202 = vunpack.c.l.b16 %v85
    %v203 = vunpack.c.l.b16 %v86
    %v204 = vunpack.c.h.b16 %v86
    %v205 = vunpack.c.l.b16 %v87
    %v206 = vunpack.c.l.b16 %v88
    %v207 = vunpack.c.h.b16 %v88
    %v208 = vunpack.c.l.b16 %v89
    %v209 = vunpack.c.l.b16 %v90
    %v210 = vunpack.c.h.b16 %v90
    %v211 = vunpack.c.l.b16 %v91
    %v212 = vunpack.c.l.b16 %v92
    %v213 = vunpack.c.h.b16 %v92
    %v214 = vunpack.c.l.b16 %v93
    %v215 = vpack.c.b16 %v170, %v167
    %v216 = vpack.c.b16 %v171, %v168
    %v217 = vpack.c.b16 %v172, %v169
    %v218 = vpack.c.b16 %v176, %v173
    %v219 = vpack.c.b16 %v177, %v174
    %v220 = vpack.c.b16 %v178, %v175
    %v221 = vpack.c.b16 %v182, %v179
    %v222 = vpack.c.b16 %v183, %v180
    %v223 = vpack.c.b16 %v184, %v181
    %v224 = vpack.c.b16 %v188, %v185
    %v225 = vpack.c.b16 %v189, %v186
    %v226 = vpack.c.b16 %v190, %v187
    %v227 = vpack.c.b16 %v194, %v191
    %v228 = vpack.c.b16 %v195, %v192
    %v229 = vpack.c.b16 %v196, %v193
    %v230 = vpack.c.b16 %v200, %v197
    %v231 = vpack.c.b16 %v201, %v198
    %v232 = vpack.c.b16 %v202, %v199
    %v233 = vpack.c.b16 %v206, %v203
    %v234 = vpack.c.b16 %v207, %v204
    %v235 = vpack.c.b16 %v208, %v205
    %v236 = vpack.c.b16 %v212, %v209
    %v237 = vpack.c.b16 %v213, %v210
    %v238 = vpack.c.b16 %v214, %v211
    %263 = vmatprep.subr.bf16.mxu0 %v216
    %264 = vmatpush1.bf16.msra.mxu0 %v215
    %265 = vmatprep.subr.bf16.mxu0 %v219
    %266 = vmatpush1.bf16.msra.mxu0 %v218
    %267 = vmatprep.subr.bf16.mxu0 %v222
    %268 = vmatpush1.bf16.msra.mxu0 %v221
    %269 = vmatprep.subr.bf16.mxu0 %v225
    %270 = vmatpush1.bf16.msra.mxu0 %v224
    %271 = vmatprep.subr.bf16.mxu0 %v228
    %272 = vmatpush1.bf16.msra.mxu0 %v227
    %273 = vmatprep.subr.bf16.mxu0 %v231
    %274 = vmatpush1.bf16.msra.mxu0 %v230
    %275 = vmatprep.subr.bf16.mxu0 %v234
    %276 = vmatpush1.bf16.msra.mxu0 %v233
    %277 = vmatprep.subr.bf16.mxu0 %v237
    %278 = vmatpush1.bf16.msra.mxu0 %v236
    %279 = vmatprep.subr.bf16.mxu0 0
    %280 = vmatpush1.bf16.msra.mxu0 0
    %281 = vmatprep.subr.bf16.mxu0 0
    %282 = vmatpush1.bf16.msra.mxu0 0
    %283 = vmatprep.subr.bf16.mxu0 0
    %284 = vmatpush1.bf16.msra.mxu0 0
    %285 = vmatprep.subr.bf16.mxu0 0
    %286 = vmatpush1.bf16.msra.mxu0 0
    %287 = vmatprep.subr.bf16.mxu0 0
    %288 = vmatpush1.bf16.msra.mxu0 0
    %289 = vmatprep.subr.bf16.mxu0 0
    %290 = vmatpush1.bf16.msra.mxu0 0
    %291 = vmatprep.subr.bf16.mxu0 0
    %292 = vmatpush1.bf16.msra.mxu0 0
    %293 = vmatprep.subr.bf16.mxu0 0
    %294 = vmatpush1.bf16.msra.mxu0 0
    %295 = vmatprep.mubr.bf16.mxu0 0
    %296 = vmatmul.mubr.bf16.gmra.mrb[0].mxu0 %v127
    %v297 = vpop.f32.mrb[0].mxu0
    %v298 = vadd.f32 %v99, %v297
    %v299 = vpop.f32.mrb[0].mxu0
    %v300 = vadd.f32 %v103, %v299
    %v301 = vpop.f32.mrb[0].mxu0
    %v302 = vadd.f32 %v99, %v301
    %v303 = vpop.f32.mrb[0].mxu0
    %v304 = vadd.f32 %v103, %v303
    %305 = vmatprep.mubr.bf16.mxu0 0
    %306 = vmatmul.mubr.bf16.gmra.mrb[0].mxu0 %v128
    %v307 = vpop.f32.mrb[0].mxu0
    %v308 = vadd.f32 %v99, %v307
    %v309 = vpop.f32.mrb[0].mxu0
    %v310 = vadd.f32 %v103, %v309
    %v311 = vpop.f32.mrb[0].mxu0
    %v312 = vadd.f32 %v99, %v311
    %v313 = vpop.f32.mrb[0].mxu0
    %v314 = vadd.f32 %v103, %v313
    %315 = vmatprep.mubr.bf16.mxu0 0
    %316 = vmatmul.mubr.bf16.gmra.mrb[0].mxu0 %v129
    %v317 = vpop.f32.mrb[0].mxu0
    %v318 = vadd.f32 %v99, %v317
    %v319 = vpop.f32.mrb[0].mxu0
    %v320 = vadd.f32 %v103, %v319
    %v321 = vpop.f32.mrb[0].mxu0
    %v322 = vadd.f32 %v99, %v321
    %v323 = vpop.f32.mrb[0].mxu0
    %v324 = vadd.f32 %v103, %v323
    %325 = vmatprep.mubr.bf16.mxu0 0
    %326 = vmatmul.mubr.bf16.gmra.mrb[0].mxu0 %v130
    %v327 = vpop.f32.mrb[0].mxu0
    %v328 = vadd.f32 %v99, %v327
    %v329 = vpop.f32.mrb[0].mxu0
    %v330 = vadd.f32 %v103, %v329
    %v331 = vpop.f32.mrb[0].mxu0
    %v332 = vadd.f32 %v99, %v331
    %v333 = vpop.f32.mrb[0].mxu0
    %v334 = vadd.f32 %v103, %v333
    %335 = vdwg.mxu0
    %336 = vmatprep.subr.bf16.mxu0 0
    %337 = vmatpush1.bf16.msra.mxu0 %v217
    %338 = vmatprep.subr.bf16.mxu0 0
    %339 = vmatpush1.bf16.msra.mxu0 %v220
    %340 = vmatprep.subr.bf16.mxu0 0
    %341 = vmatpush1.bf16.msra.mxu0 %v223
    %342 = vmatprep.subr.bf16.mxu0 0
    %343 = vmatpush1.bf16.msra.mxu0 %v226
    %344 = vmatprep.subr.bf16.mxu0 0
    %345 = vmatpush1.bf16.msra.mxu0 %v229
    %346 = vmatprep.subr.bf16.mxu0 0
    %347 = vmatpush1.bf16.msra.mxu0 %v232
    %348 = vmatprep.subr.bf16.mxu0 0
    %349 = vmatpush1.bf16.msra.mxu0 %v235
    %350 = vmatprep.subr.bf16.mxu0 0
    %351 = vmatpush1.bf16.msra.mxu0 %v238
    %352 = vmatprep.subr.bf16.mxu0 0
    %353 = vmatpush1.bf16.msra.mxu0 0
    %354 = vmatprep.subr.bf16.mxu0 0
    %355 = vmatpush1.bf16.msra.mxu0 0
    %356 = vmatprep.subr.bf16.mxu0 0
    %357 = vmatpush1.bf16.msra.mxu0 0
    %358 = vmatprep.subr.bf16.mxu0 0
    %359 = vmatpush1.bf16.msra.mxu0 0
    %360 = vmatprep.subr.bf16.mxu0 0
    %361 = vmatpush1.bf16.msra.mxu0 0
    %362 = vmatprep.subr.bf16.mxu0 0
    %363 = vmatpush1.bf16.msra.mxu0 0
    %364 = vmatprep.subr.bf16.mxu0 0
    %365 = vmatpush1.bf16.msra.mxu0 0
    %366 = vmatprep.subr.bf16.mxu0 0
    %367 = vmatpush1.bf16.msra.mxu0 0
    %368 = vmatprep.mubr.bf16.mxu0 0
    %369 = vmatmul.mubr.bf16.gmra.mrb[0].mxu0 %v127
    %v370 = vpop.f32.mrb[0].mxu0
    %v371 = vadd.f32 %v107, %v370
    %v372 = vpop.f32.mrb[0].mxu0
    %v373 = vpop.f32.mrb[0].mxu0
    %v374 = vadd.f32 %v107, %v373
    %v375 = vpop.f32.mrb[0].mxu0
    %376 = vmatprep.mubr.bf16.mxu0 0
    %377 = vmatmul.mubr.bf16.gmra.mrb[0].mxu0 %v128
    %v378 = vpop.f32.mrb[0].mxu0
    %v379 = vadd.f32 %v107, %v378
    %v380 = vpop.f32.mrb[0].mxu0
    %v381 = vpop.f32.mrb[0].mxu0
    %v382 = vadd.f32 %v107, %v381
    %v383 = vpop.f32.mrb[0].mxu0
    %384 = vmatprep.mubr.bf16.mxu0 0
    %385 = vmatmul.mubr.bf16.gmra.mrb[0].mxu0 %v129
    %v386 = vpop.f32.mrb[0].mxu0
    %v387 = vadd.f32 %v107, %v386
    %v388 = vpop.f32.mrb[0].mxu0
    %v389 = vpop.f32.mrb[0].mxu0
    %v390 = vadd.f32 %v107, %v389
    %v391 = vpop.f32.mrb[0].mxu0
    %392 = vmatprep.mubr.bf16.mxu0 0
    %393 = vmatmul.mubr.bf16.gmra.mrb[0].mxu0 %v130
    %v394 = vpop.f32.mrb[0].mxu0
    %v395 = vadd.f32 %v107, %v394
    %v396 = vpop.f32.mrb[0].mxu0
    %v397 = vpop.f32.mrb[0].mxu0
    %v398 = vadd.f32 %v107, %v397
    %v399 = vpop.f32.mrb[0].mxu0
    %400 = vdwg.mxu0
    %401 = vst [vmem:[#allocation2] sm:$0xff] %v298
    %402 = vst [vmem:[#allocation2 + $0x8] sm:$0xff] %v300
    %403 = vst [vmem:[#allocation2 + $0x10] sm:$0xff] %v371
    %404 = vst [vmem:[#allocation2 + $0x18] sm:$0xff] %v302
    %405 = vst [vmem:[#allocation2 + $0x20] sm:$0xff] %v304
    %406 = vst [vmem:[#allocation2 + $0x28] sm:$0xff] %v374
    %407 = vst [vmem:[#allocation2 + $0x30] sm:$0xff] %v308
    %408 = vst [vmem:[#allocation2 + $0x38] sm:$0xff] %v310
    %409 = vst [vmem:[#allocation2 + $0x40] sm:$0xff] %v379
    %410 = vst [vmem:[#allocation2 + $0x48] sm:$0xff] %v312
    %411 = vst [vmem:[#allocation2 + $0x50] sm:$0xff] %v314
    %412 = vst [vmem:[#allocation2 + $0x58] sm:$0xff] %v382
    %413 = vst [vmem:[#allocation2 + $0x60] sm:$0xff] %v318
    %414 = vst [vmem:[#allocation2 + $0x68] sm:$0xff] %v320
    %415 = vst [vmem:[#allocation2 + $0x70] sm:$0xff] %v387
    %416 = vst [vmem:[#allocation2 + $0x78] sm:$0xff] %v322
    %417 = vst [vmem:[#allocation2 + $0x80] sm:$0xff] %v324
    %418 = vst [vmem:[#allocation2 + $0x88] sm:$0xff] %v390
    %419 = vst [vmem:[#allocation2 + $0x90] sm:$0xff] %v328
    %420 = vst [vmem:[#allocation2 + $0x98] sm:$0xff] %v330
    %421 = vst [vmem:[#allocation2 + $0xa0] sm:$0xff] %v395
    %422 = vst [vmem:[#allocation2 + $0xa8] sm:$0xff] %v332
    %423 = vst [vmem:[#allocation2 + $0xb0] sm:$0xff] %v334
    %424 = vst [vmem:[#allocation2 + $0xb8] sm:$0xff] %v398
    %v425 = vld [vmem:[#allocation6] sm:$0xff]
    %v426 = vld [vmem:[#allocation6 + $0x8] sm:$0xf]
    %v427 = vld [vmem:[#allocation6 + $0xc] sm:$0xff]
    %v428 = vld [vmem:[#allocation6 + $0x14] sm:$0xf]
    %v429 = vld [vmem:[#allocation6 + $0x18] sm:$0xff]
    %v430 = vld [vmem:[#allocation6 + $0x20] sm:$0xf]
    %v431 = vld [vmem:[#allocation6 + $0x24] sm:$0xff]
    %v432 = vld [vmem:[#allocation6 + $0x2c] sm:$0xf]
    %v433 = vld [vmem:[#allocation6 + $0x30] sm:$0xff]
    %v434 = vld [vmem:[#allocation6 + $0x38] sm:$0xf]
    %v435 = vld [vmem:[#allocation6 + $0x3c] sm:$0xff]
    %v436 = vld [vmem:[#allocation6 + $0x44] sm:$0xf]
    %v437 = vld [vmem:[#allocation6 + $0x48] sm:$0xff]
    %v438 = vld [vmem:[#allocation6 + $0x50] sm:$0xf]
    %v439 = vld [vmem:[#allocation6 + $0x54] sm:$0xff]
    %v440 = vld [vmem:[#allocation6 + $0x5c] sm:$0xf]
    %v441 = vld [vmem:[#allocation6 + $0x60] sm:$0xff]
    %v442 = vld [vmem:[#allocation6 + $0x68] sm:$0xf]
    %v443 = vld [vmem:[#allocation6 + $0x6c] sm:$0xff]
    %v444 = vld [vmem:[#allocation6 + $0x74] sm:$0xf]
    %v445 = vld [vmem:[#allocation6 + $0x78] sm:$0xff]
    %v446 = vld [vmem:[#allocation6 + $0x80] sm:$0xf]
    %v447 = vld [vmem:[#allocation6 + $0x84] sm:$0xff]
    %v448 = vld [vmem:[#allocation6 + $0x8c] sm:$0xf]
    %v449 = vld [vmem:[#allocation6 + $0x90] sm:$0xff]
    %v450 = vld [vmem:[#allocation6 + $0x98] sm:$0xf]
    %v451 = vld [vmem:[#allocation6 + $0x9c] sm:$0xff]
    %v452 = vld [vmem:[#allocation6 + $0xa4] sm:$0xf]
    %v453 = vld [vmem:[#allocation6 + $0xa8] sm:$0xff]
    %v454 = vld [vmem:[#allocation6 + $0xb0] sm:$0xf]
    %v455 = vld [vmem:[#allocation6 + $0xb4] sm:$0xff]
    %v456 = vld [vmem:[#allocation6 + $0xbc] sm:$0xf]
    %v457 = vld [vmem:[%s4] sm:$0x1]
    %v459 = vlaneseq
    %v460 = vshrl.u32 %v459, 7
    %v461 = vsub.s32 0, %v460
    %v462 = vrot.slane %v457, %v461
    %v464 = vld [vmem:[#allocation3] sm:$0xff]
    %v465 = vpack.c.bf16 %v464, %v464
    %v498 = vunpack.c.l.b16 %v425
    %v499 = vunpack.c.h.b16 %v425
    %v500 = vunpack.c.l.b16 %v426
    %v501 = vunpack.c.l.b16 %v427
    %v502 = vunpack.c.h.b16 %v427
    %v503 = vunpack.c.l.b16 %v428
    %v504 = vunpack.c.l.b16 %v429
    %v505 = vunpack.c.h.b16 %v429
    %v506 = vunpack.c.l.b16 %v430
    %v507 = vunpack.c.l.b16 %v431
    %v508 = vunpack.c.h.b16 %v431
    %v509 = vunpack.c.l.b16 %v432
    %v510 = vunpack.c.l.b16 %v433
    %v511 = vunpack.c.h.b16 %v433
    %v512 = vunpack.c.l.b16 %v434
    %v513 = vunpack.c.l.b16 %v435
    %v514 = vunpack.c.h.b16 %v435
    %v515 = vunpack.c.l.b16 %v436
    %v516 = vunpack.c.l.b16 %v437
    %v517 = vunpack.c.h.b16 %v437
    %v518 = vunpack.c.l.b16 %v438
    %v519 = vunpack.c.l.b16 %v439
    %v520 = vunpack.c.h.b16 %v439
    %v521 = vunpack.c.l.b16 %v440
    %v522 = vunpack.c.l.b16 %v441
    %v523 = vunpack.c.h.b16 %v441
    %v524 = vunpack.c.l.b16 %v442
    %v525 = vunpack.c.l.b16 %v443
    %v526 = vunpack.c.h.b16 %v443
    %v527 = vunpack.c.l.b16 %v444
    %v528 = vunpack.c.l.b16 %v445
    %v529 = vunpack.c.h.b16 %v445
    %v530 = vunpack.c.l.b16 %v446
    %v531 = vunpack.c.l.b16 %v447
    %v532 = vunpack.c.h.b16 %v447
    %v533 = vunpack.c.l.b16 %v448
    %v534 = vunpack.c.l.b16 %v449
    %v535 = vunpack.c.h.b16 %v449
    %v536 = vunpack.c.l.b16 %v450
    %v537 = vunpack.c.l.b16 %v451
    %v538 = vunpack.c.h.b16 %v451
    %v539 = vunpack.c.l.b16 %v452
    %v540 = vunpack.c.l.b16 %v453
    %v541 = vunpack.c.h.b16 %v453
    %v542 = vunpack.c.l.b16 %v454
    %v543 = vunpack.c.l.b16 %v455
    %v544 = vunpack.c.h.b16 %v455
    %v545 = vunpack.c.l.b16 %v456
    %v546 = vpack.c.b16 %v501, %v498
    %v547 = vpack.c.b16 %v502, %v499
    %v548 = vpack.c.b16 %v503, %v500
    %v549 = vpack.c.b16 %v507, %v504
    %v550 = vpack.c.b16 %v508, %v505
    %v551 = vpack.c.b16 %v509, %v506
    %v552 = vpack.c.b16 %v513, %v510
    %v553 = vpack.c.b16 %v514, %v511
    %v554 = vpack.c.b16 %v515, %v512
    %v555 = vpack.c.b16 %v519, %v516
    %v556 = vpack.c.b16 %v520, %v517
    %v557 = vpack.c.b16 %v521, %v518
    %v558 = vpack.c.b16 %v525, %v522
    %v559 = vpack.c.b16 %v526, %v523
    %v560 = vpack.c.b16 %v527, %v524
    %v561 = vpack.c.b16 %v531, %v528
    %v562 = vpack.c.b16 %v532, %v529
    %v563 = vpack.c.b16 %v533, %v530
    %v564 = vpack.c.b16 %v537, %v534
    %v565 = vpack.c.b16 %v538, %v535
    %v566 = vpack.c.b16 %v539, %v536
    %v567 = vpack.c.b16 %v543, %v540
    %v568 = vpack.c.b16 %v544, %v541
    %v569 = vpack.c.b16 %v545, %v542
    %594 = vmatprep.subr.bf16.mxu0 %v547
    %595 = vmatpush1.bf16.msra.mxu0 %v546
    %596 = vmatprep.subr.bf16.mxu0 %v550
    %597 = vmatpush1.bf16.msra.mxu0 %v549
    %598 = vmatprep.subr.bf16.mxu0 %v553
    %599 = vmatpush1.bf16.msra.mxu0 %v552
    %600 = vmatprep.subr.bf16.mxu0 %v556
    %601 = vmatpush1.bf16.msra.mxu0 %v555
    %602 = vmatprep.subr.bf16.mxu0 %v559
    %603 = vmatpush1.bf16.msra.mxu0 %v558
    %604 = vmatprep.subr.bf16.mxu0 %v562
    %605 = vmatpush1.bf16.msra.mxu0 %v561
    %606 = vmatprep.subr.bf16.mxu0 %v565
    %607 = vmatpush1.bf16.msra.mxu0 %v564
    %608 = vmatprep.subr.bf16.mxu0 %v568
    %609 = vmatpush1.bf16.msra.mxu0 %v567
    %610 = vmatprep.subr.bf16.mxu0 0
    %611 = vmatpush1.bf16.msra.mxu0 0
    %612 = vmatprep.subr.bf16.mxu0 0
    %613 = vmatpush1.bf16.msra.mxu0 0
    %614 = vmatprep.subr.bf16.mxu0 0
    %615 = vmatpush1.bf16.msra.mxu0 0
    %616 = vmatprep.subr.bf16.mxu0 0
    %617 = vmatpush1.bf16.msra.mxu0 0
    %618 = vmatprep.subr.bf16.mxu0 0
    %619 = vmatpush1.bf16.msra.mxu0 0
    %620 = vmatprep.subr.bf16.mxu0 0
    %621 = vmatpush1.bf16.msra.mxu0 0
    %622 = vmatprep.subr.bf16.mxu0 0
    %623 = vmatpush1.bf16.msra.mxu0 0
    %624 = vmatprep.subr.bf16.mxu0 0
    %625 = vmatpush1.bf16.msra.mxu0 0
    %626 = vmatprep.mubr.bf16.mxu0 0
    %627 = vmatmul.mubr.bf16.gmra.mrb[0].mxu0 %v465
    %v628 = vpop.f32.mrb[0].mxu0
    %v629 = vadd.f32 0.0, %v628
    %v630 = vpop.f32.mrb[0].mxu0
    %v631 = vadd.f32 0.0, %v630
    %v632 = vpop.f32.mrb[0].mxu0
    %v633 = vpop.f32.mrb[0].mxu0
    %634 = vdwg.mxu0
    %635 = vmatprep.subr.bf16.mxu0 0
    %636 = vmatpush1.bf16.msra.mxu0 %v548
    %637 = vmatprep.subr.bf16.mxu0 0
    %638 = vmatpush1.bf16.msra.mxu0 %v551
    %639 = vmatprep.subr.bf16.mxu0 0
    %640 = vmatpush1.bf16.msra.mxu0 %v554
    %641 = vmatprep.subr.bf16.mxu0 0
    %642 = vmatpush1.bf16.msra.mxu0 %v557
    %643 = vmatprep.subr.bf16.mxu0 0
    %644 = vmatpush1.bf16.msra.mxu0 %v560
    %645 = vmatprep.subr.bf16.mxu0 0
    %646 = vmatpush1.bf16.msra.mxu0 %v563
    %647 = vmatprep.subr.bf16.mxu0 0
    %648 = vmatpush1.bf16.msra.mxu0 %v566
    %649 = vmatprep.subr.bf16.mxu0 0
    %650 = vmatpush1.bf16.msra.mxu0 %v569
    %651 = vmatprep.subr.bf16.mxu0 0
    %652 = vmatpush1.bf16.msra.mxu0 0
    %653 = vmatprep.subr.bf16.mxu0 0
    %654 = vmatpush1.bf16.msra.mxu0 0
    %655 = vmatprep.subr.bf16.mxu0 0
    %656 = vmatpush1.bf16.msra.mxu0 0
    %657 = vmatprep.subr.bf16.mxu0 0
    %658 = vmatpush1.bf16.msra.mxu0 0
    %659 = vmatprep.subr.bf16.mxu0 0
    %660 = vmatpush1.bf16.msra.mxu0 0
    %661 = vmatprep.subr.bf16.mxu0 0
    %662 = vmatpush1.bf16.msra.mxu0 0
    %663 = vmatprep.subr.bf16.mxu0 0
    %664 = vmatpush1.bf16.msra.mxu0 0
    %665 = vmatprep.subr.bf16.mxu0 0
    %666 = vmatpush1.bf16.msra.mxu0 0
    %667 = vmatprep.mubr.bf16.mxu0 0
    %668 = vmatmul.mubr.bf16.gmra.mrb[0].mxu0 %v465
    %v669 = vpop.f32.mrb[0].mxu0
    %v670 = vadd.f32 0.0, %v669
    %v671 = vpop.f32.mrb[0].mxu0
    %v672 = vpop.f32.mrb[0].mxu0
    %v673 = vpop.f32.mrb[0].mxu0
    %674 = vdwg.mxu0
    %v675 = vld [vmem:[#allocation2] sm:$0xff]
    %v676 = vld [vmem:[#allocation2 + $0x8] sm:$0xff]
    %v677 = vld [vmem:[#allocation2 + $0x10] sm:$0xff]
    %v678 = vadd.f32 %v675, %v629
    %v679 = vxor.u32 %v678, 2147483648
    %v680 = vmul.f32 %v679, 1.442695
    %v681 = vpow.pop %v680
    %v682 = vadd.f32 %v681, 1.0
    %v683 = vrcp.pop %v682
    %v684 = vmul.f32 1.0, %v683
    %v685 = vadd.f32 %v676, %v631
    %v686 = vxor.u32 %v685, 2147483648
    %v687 = vmul.f32 %v686, 1.442695
    %v688 = vpow.pop %v687
    %v689 = vadd.f32 %v688, 1.0
    %v690 = vrcp.pop %v689
    %v691 = vmul.f32 1.0, %v690
    %v692 = vadd.f32 %v670, %v462
    %v693 = vmul.f32 %v684, %v692
    %v694 = vadd.f32 %v677, %v693
    %v695 = vtanh.pop %v694
    %v696 = vsub.f32 1.0, %v691
    %v697 = vmul.f32 %v696, %v695
    %v698 = vmul.f32 %v691, %v464
    %v699 = vadd.f32 %v697, %v698
    %v700 = vpack.c.bf16 %v699, %v699
    %701 = vst [vmem:[%s5] sm:$0xf] %v700
    %702 = vmatprep.subr.bf16.mxu0 %v547
    %703 = vmatpush1.bf16.msra.mxu0 %v546
    %704 = vmatprep.subr.bf16.mxu0 %v550
    %705 = vmatpush1.bf16.msra.mxu0 %v549
    %706 = vmatprep.subr.bf16.mxu0 %v553
    %707 = vmatpush1.bf16.msra.mxu0 %v552
    %708 = vmatprep.subr.bf16.mxu0 %v556
    %709 = vmatpush1.bf16.msra.mxu0 %v555
    %710 = vmatprep.subr.bf16.mxu0 %v559
    %711 = vmatpush1.bf16.msra.mxu0 %v558
    %712 = vmatprep.subr.bf16.mxu0 %v562
    %713 = vmatpush1.bf16.msra.mxu0 %v561
    %714 = vmatprep.subr.bf16.mxu0 %v565
    %715 = vmatpush1.bf16.msra.mxu0 %v564
    %716 = vmatprep.subr.bf16.mxu0 %v568
    %717 = vmatpush1.bf16.msra.mxu0 %v567
    %718 = vmatprep.subr.bf16.mxu0 0
    %719 = vmatpush1.bf16.msra.mxu0 0
    %720 = vmatprep.subr.bf16.mxu0 0
    %721 = vmatpush1.bf16.msra.mxu0 0
    %722 = vmatprep.subr.bf16.mxu0 0
    %723 = vmatpush1.bf16.msra.mxu0 0
    %724 = vmatprep.subr.bf16.mxu0 0
    %725 = vmatpush1.bf16.msra.mxu0 0
    %726 = vmatprep.subr.bf16.mxu0 0
    %727 = vmatpush1.bf16.msra.mxu0 0
    %728 = vmatprep.subr.bf16.mxu0 0
    %729 = vmatpush1.bf16.msra.mxu0 0
    %730 = vmatprep.subr.bf16.mxu0 0
    %731 = vmatpush1.bf16.msra.mxu0 0
    %732 = vmatprep.subr.bf16.mxu0 0
    %733 = vmatpush1.bf16.msra.mxu0 0
    %734 = vmatprep.mubr.bf16.mxu0 0
    %735 = vmatmul.mubr.bf16.gmra.mrb[0].mxu0 %v700
    %v736 = vpop.f32.mrb[0].mxu0
    %v737 = vadd.f32 0.0, %v736
    %v738 = vpop.f32.mrb[0].mxu0
    %v739 = vadd.f32 0.0, %v738
    %v740 = vpop.f32.mrb[0].mxu0
    %v741 = vpop.f32.mrb[0].mxu0
    %742 = vdwg.mxu0
    %743 = vmatprep.subr.bf16.mxu0 0
    %744 = vmatpush1.bf16.msra.mxu0 %v548
    %745 = vmatprep.subr.bf16.mxu0 0
    %746 = vmatpush1.bf16.msra.mxu0 %v551
    %747 = vmatprep.subr.bf16.mxu0 0
    %748 = vmatpush1.bf16.msra.mxu0 %v554
    %749 = vmatprep.subr.bf16.mxu0 0
    %750 = vmatpush1.bf16.msra.mxu0 %v557
    %751 = vmatprep.subr.bf16.mxu0 0
    %752 = vmatpush1.bf16.msra.mxu0 %v560
    %753 = vmatprep.subr.bf16.mxu0 0
    %754 = vmatpush1.bf16.msra.mxu0 %v563
    %755 = vmatprep.subr.bf16.mxu0 0
    %756 = vmatpush1.bf16.msra.mxu0 %v566
    %757 = vmatprep.subr.bf16.mxu0 0
    %758 = vmatpush1.bf16.msra.mxu0 %v569
    %759 = vmatprep.subr.bf16.mxu0 0
    %760 = vmatpush1.bf16.msra.mxu0 0
    %761 = vmatprep.subr.bf16.mxu0 0
    %762 = vmatpush1.bf16.msra.mxu0 0
    %763 = vmatprep.subr.bf16.mxu0 0
    %764 = vmatpush1.bf16.msra.mxu0 0
    %765 = vmatprep.subr.bf16.mxu0 0
    %766 = vmatpush1.bf16.msra.mxu0 0
    %767 = vmatprep.subr.bf16.mxu0 0
    %768 = vmatpush1.bf16.msra.mxu0 0
    %769 = vmatprep.subr.bf16.mxu0 0
    %770 = vmatpush1.bf16.msra.mxu0 0
    %771 = vmatprep.subr.bf16.mxu0 0
    %772 = vmatpush1.bf16.msra.mxu0 0
    %773 = vmatprep.subr.bf16.mxu0 0
    %774 = vmatpush1.bf16.msra.mxu0 0
    %775 = vmatprep.mubr.bf16.mxu0 0
    %776 = vmatmul.mubr.bf16.gmra.mrb[0].mxu0 %v700
    %v777 = vpop.f32.mrb[0].mxu0
    %v778 = vadd.f32 0.0, %v777
    %v779 = vpop.f32.mrb[0].mxu0
    %v780 = vpop.f32.mrb[0].mxu0
    %v781 = vpop.f32.mrb[0].mxu0
    %782 = vdwg.mxu0
    %s783 = scalar_lea.vmem [#allocation2], 24
    %v784 = vld [vmem:[%s783] sm:$0xff]
    %v785 = vld [vmem:[%s783 + $0x8] sm:$0xff]
    %v786 = vld [vmem:[%s783 + $0x10] sm:$0xff]
    %v787 = vadd.f32 %v784, %v737
    %v788 = vxor.u32 %v787, 2147483648
    %v789 = vmul.f32 %v788, 1.442695
    %v790 = vpow.pop %v789
    %v791 = vadd.f32 %v790, 1.0
    %v792 = vrcp.pop %v791
    %v793 = vmul.f32 1.0, %v792
    %v794 = vadd.f32 %v785, %v739
    %v795 = vxor.u32 %v794, 2147483648
    %v796 = vmul.f32 %v795, 1.442695
    %v797 = vpow.pop %v796
    %v798 = vadd.f32 %v797, 1.0
    %v799 = vrcp.pop %v798
    %v800 = vmul.f32 1.0, %v799
    %v801 = vadd.f32 %v778, %v462
    %v802 = vmul.f32 %v793, %v801
    %v803 = vadd.f32 %v786, %v802
    %v804 = vtanh.pop %v803
    %v805 = vsub.f32 1.0, %v800
    %v806 = vmul.f32 %v805, %v804
    %v807 = vmul.f32 %v800, %v699
    %v808 = vadd.f32 %v806, %v807
    %v809 = vpack.c.bf16 %v808, %v808
    %s810 = scalar_lea.vmem %s5, 4
    %811 = vst [vmem:[%s810] sm:$0xf] %v809
    %812 = vmatprep.subr.bf16.mxu0 %v547
    %813 = vmatpush1.bf16.msra.mxu0 %v546
    %814 = vmatprep.subr.bf16.mxu0 %v550
    %815 = vmatpush1.bf16.msra.mxu0 %v549
    %816 = vmatprep.subr.bf16.mxu0 %v553
    %817 = vmatpush1.bf16.msra.mxu0 %v552
    %818 = vmatprep.subr.bf16.mxu0 %v556
    %819 = vmatpush1.bf16.msra.mxu0 %v555
    %820 = vmatprep.subr.bf16.mxu0 %v559
    %821 = vmatpush1.bf16.msra.mxu0 %v558
    %822 = vmatprep.subr.bf16.mxu0 %v562
    %823 = vmatpush1.bf16.msra.mxu0 %v561
    %824 = vmatprep.subr.bf16.mxu0 %v565
    %825 = vmatpush1.bf16.msra.mxu0 %v564
    %826 = vmatprep.subr.bf16.mxu0 %v568
    %827 = vmatpush1.bf16.msra.mxu0 %v567
    %828 = vmatprep.subr.bf16.mxu0 0
    %829 = vmatpush1.bf16.msra.mxu0 0
    %830 = vmatprep.subr.bf16.mxu0 0
    %831 = vmatpush1.bf16.msra.mxu0 0
    %832 = vmatprep.subr.bf16.mxu0 0
    %833 = vmatpush1.bf16.msra.mxu0 0
    %834 = vmatprep.subr.bf16.mxu0 0
    %835 = vmatpush1.bf16.msra.mxu0 0
    %836 = vmatprep.subr.bf16.mxu0 0
    %837 = vmatpush1.bf16.msra.mxu0 0
    %838 = vmatprep.subr.bf16.mxu0 0
    %839 = vmatpush1.bf16.msra.mxu0 0
    %840 = vmatprep.subr.bf16.mxu0 0
    %841 = vmatpush1.bf16.msra.mxu0 0
    %842 = vmatprep.subr.bf16.mxu0 0
    %843 = vmatpush1.bf16.msra.mxu0 0
    %844 = vmatprep.mubr.bf16.mxu0 0
    %845 = vmatmul.mubr.bf16.gmra.mrb[0].mxu0 %v809
    %v846 = vpop.f32.mrb[0].mxu0
    %v847 = vadd.f32 0.0, %v846
    %v848 = vpop.f32.mrb[0].mxu0
    %v849 = vadd.f32 0.0, %v848
    %v850 = vpop.f32.mrb[0].mxu0
    %v851 = vpop.f32.mrb[0].mxu0
    %852 = vdwg.mxu0
    %853 = vmatprep.subr.bf16.mxu0 0
    %854 = vmatpush1.bf16.msra.mxu0 %v548
    %855 = vmatprep.subr.bf16.mxu0 0
    %856 = vmatpush1.bf16.msra.mxu0 %v551
    %857 = vmatprep.subr.bf16.mxu0 0
    %858 = vmatpush1.bf16.msra.mxu0 %v554
    %859 = vmatprep.subr.bf16.mxu0 0
    %860 = vmatpush1.bf16.msra.mxu0 %v557
    %861 = vmatprep.subr.bf16.mxu0 0
    %862 = vmatpush1.bf16.msra.mxu0 %v560
    %863 = vmatprep.subr.bf16.mxu0 0
    %864 = vmatpush1.bf16.msra.mxu0 %v563
    %865 = vmatprep.subr.bf16.mxu0 0
    %866 = vmatpush1.bf16.msra.mxu0 %v566
    %867 = vmatprep.subr.bf16.mxu0 0
    %868 = vmatpush1.bf16.msra.mxu0 %v569
    %869 = vmatprep.subr.bf16.mxu0 0
    %870 = vmatpush1.bf16.msra.mxu0 0
    %871 = vmatprep.subr.bf16.mxu0 0
    %872 = vmatpush1.bf16.msra.mxu0 0
    %873 = vmatprep.subr.bf16.mxu0 0
    %874 = vmatpush1.bf16.msra.mxu0 0
    %875 = vmatprep.subr.bf16.mxu0 0
    %876 = vmatpush1.bf16.msra.mxu0 0
    %877 = vmatprep.subr.bf16.mxu0 0
    %878 = vmatpush1.bf16.msra.mxu0 0
    %879 = vmatprep.subr.bf16.mxu0 0
    %880 = vmatpush1.bf16.msra.mxu0 0
    %881 = vmatprep.subr.bf16.mxu0 0
    %882 = vmatpush1.bf16.msra.mxu0 0
    %883 = vmatprep.subr.bf16.mxu0 0
    %884 = vmatpush1.bf16.msra.mxu0 0
    %885 = vmatprep.mubr.bf16.mxu0 0
    %886 = vmatmul.mubr.bf16.gmra.mrb[0].mxu0 %v809
    %v887 = vpop.f32.mrb[0].mxu0
    %v888 = vadd.f32 0.0, %v887
    %v889 = vpop.f32.mrb[0].mxu0
    %v890 = vpop.f32.mrb[0].mxu0
    %v891 = vpop.f32.mrb[0].mxu0
    %892 = vdwg.mxu0
    %s893 = scalar_lea.vmem [#allocation2], 48
    %v894 = vld [vmem:[%s893] sm:$0xff]
    %v895 = vld [vmem:[%s893 + $0x8] sm:$0xff]
    %v896 = vld [vmem:[%s893 + $0x10] sm:$0xff]
    %v897 = vadd.f32 %v894, %v847
    %v898 = vxor.u32 %v897, 2147483648
    %v899 = vmul.f32 %v898, 1.442695
    %v900 = vpow.pop %v899
    %v901 = vadd.f32 %v900, 1.0
    %v902 = vrcp.pop %v901
    %v903 = vmul.f32 1.0, %v902
    %v904 = vadd.f32 %v895, %v849
    %v905 = vxor.u32 %v904, 2147483648
    %v906 = vmul.f32 %v905, 1.442695
    %v907 = vpow.pop %v906
    %v908 = vadd.f32 %v907, 1.0
    %v909 = vrcp.pop %v908
    %v910 = vmul.f32 1.0, %v909
    %v911 = vadd.f32 %v888, %v462
    %v912 = vmul.f32 %v903, %v911
    %v913 = vadd.f32 %v896, %v912
    %v914 = vtanh.pop %v913
    %v915 = vsub.f32 1.0, %v910
    %v916 = vmul.f32 %v915, %v914
    %v917 = vmul.f32 %v910, %v808
    %v918 = vadd.f32 %v916, %v917
    %v919 = vpack.c.bf16 %v918, %v918
    %s920 = scalar_lea.vmem %s5, 8
    %921 = vst [vmem:[%s920] sm:$0xf] %v919
    %922 = vmatprep.subr.bf16.mxu0 %v547
    %923 = vmatpush1.bf16.msra.mxu0 %v546
    %924 = vmatprep.subr.bf16.mxu0 %v550
    %925 = vmatpush1.bf16.msra.mxu0 %v549
    %926 = vmatprep.subr.bf16.mxu0 %v553
    %927 = vmatpush1.bf16.msra.mxu0 %v552
    %928 = vmatprep.subr.bf16.mxu0 %v556
    %929 = vmatpush1.bf16.msra.mxu0 %v555
    %930 = vmatprep.subr.bf16.mxu0 %v559
    %931 = vmatpush1.bf16.msra.mxu0 %v558
    %932 = vmatprep.subr.bf16.mxu0 %v562
    %933 = vmatpush1.bf16.msra.mxu0 %v561
    %934 = vmatprep.subr.bf16.mxu0 %v565
    %935 = vmatpush1.bf16.msra.mxu0 %v564
    %936 = vmatprep.subr.bf16.mxu0 %v568
    %937 = vmatpush1.bf16.msra.mxu0 %v567
    %938 = vmatprep.subr.bf16.mxu0 0
    %939 = vmatpush1.bf16.msra.mxu0 0
    %940 = vmatprep.subr.bf16.mxu0 0
    %941 = vmatpush1.bf16.msra.mxu0 0
    %942 = vmatprep.subr.bf16.mxu0 0
    %943 = vmatpush1.bf16.msra.mxu0 0
    %944 = vmatprep.subr.bf16.mxu0 0
    %945 = vmatpush1.bf16.msra.mxu0 0
    %946 = vmatprep.subr.bf16.mxu0 0
    %947 = vmatpush1.bf16.msra.mxu0 0
    %948 = vmatprep.subr.bf16.mxu0 0
    %949 = vmatpush1.bf16.msra.mxu0 0
    %950 = vmatprep.subr.bf16.mxu0 0
    %951 = vmatpush1.bf16.msra.mxu0 0
    %952 = vmatprep.subr.bf16.mxu0 0
    %953 = vmatpush1.bf16.msra.mxu0 0
    %954 = vmatprep.mubr.bf16.mxu0 0
    %955 = vmatmul.mubr.bf16.gmra.mrb[0].mxu0 %v919
    %v956 = vpop.f32.mrb[0].mxu0
    %v957 = vadd.f32 0.0, %v956
    %v958 = vpop.f32.mrb[0].mxu0
    %v959 = vadd.f32 0.0, %v958
    %v960 = vpop.f32.mrb[0].mxu0
    %v961 = vpop.f32.mrb[0].mxu0
    %962 = vdwg.mxu0
    %963 = vmatprep.subr.bf16.mxu0 0
    %964 = vmatpush1.bf16.msra.mxu0 %v548
    %965 = vmatprep.subr.bf16.mxu0 0
    %966 = vmatpush1.bf16.msra.mxu0 %v551
    %967 = vmatprep.subr.bf16.mxu0 0
    %968 = vmatpush1.bf16.msra.mxu0 %v554
    %969 = vmatprep.subr.bf16.mxu0 0
    %970 = vmatpush1.bf16.msra.mxu0 %v557
    %971 = vmatprep.subr.bf16.mxu0 0
    %972 = vmatpush1.bf16.msra.mxu0 %v560
    %973 = vmatprep.subr.bf16.mxu0 0
    %974 = vmatpush1.bf16.msra.mxu0 %v563
    %975 = vmatprep.subr.bf16.mxu0 0
    %976 = vmatpush1.bf16.msra.mxu0 %v566
    %977 = vmatprep.subr.bf16.mxu0 0
    %978 = vmatpush1.bf16.msra.mxu0 %v569
    %979 = vmatprep.subr.bf16.mxu0 0
    %980 = vmatpush1.bf16.msra.mxu0 0
    %981 = vmatprep.subr.bf16.mxu0 0
    %982 = vmatpush1.bf16.msra.mxu0 0
    %983 = vmatprep.subr.bf16.mxu0 0
    %984 = vmatpush1.bf16.msra.mxu0 0
    %985 = vmatprep.subr.bf16.mxu0 0
    %986 = vmatpush1.bf16.msra.mxu0 0
    %987 = vmatprep.subr.bf16.mxu0 0
    %988 = vmatpush1.bf16.msra.mxu0 0
    %989 = vmatprep.subr.bf16.mxu0 0
    %990 = vmatpush1.bf16.msra.mxu0 0
    %991 = vmatprep.subr.bf16.mxu0 0
    %992 = vmatpush1.bf16.msra.mxu0 0
    %993 = vmatprep.subr.bf16.mxu0 0
    %994 = vmatpush1.bf16.msra.mxu0 0
    %995 = vmatprep.mubr.bf16.mxu0 0
    %996 = vmatmul.mubr.bf16.gmra.mrb[0].mxu0 %v919
    %v997 = vpop.f32.mrb[0].mxu0
    %v998 = vadd.f32 0.0, %v997
    %v999 = vpop.f32.mrb[0].mxu0
    %v1000 = vpop.f32.mrb[0].mxu0
    %v1001 = vpop.f32.mrb[0].mxu0
    %1002 = vdwg.mxu0
    %s1003 = scalar_lea.vmem [#allocation2], 72
    %v1004 = vld [vmem:[%s1003] sm:$0xff]
    %v1005 = vld [vmem:[%s1003 + $0x8] sm:$0xff]
    %v1006 = vld [vmem:[%s1003 + $0x10] sm:$0xff]
    %v1007 = vadd.f32 %v1004, %v957
    %v1008 = vxor.u32 %v1007, 2147483648
    %v1009 = vmul.f32 %v1008, 1.442695
    %v1010 = vpow.pop %v1009
    %v1011 = vadd.f32 %v1010, 1.0
    %v1012 = vrcp.pop %v1011
    %v1013 = vmul.f32 1.0, %v1012
    %v1014 = vadd.f32 %v1005, %v959
    %v1015 = vxor.u32 %v1014, 2147483648
    %v1016 = vmul.f32 %v1015, 1.442695
    %v1017 = vpow.pop %v1016
    %v1018 = vadd.f32 %v1017, 1.0
    %v1019 = vrcp.pop %v1018
    %v1020 = vmul.f32 1.0, %v1019
    %v1021 = vadd.f32 %v998, %v462
    %v1022 = vmul.f32 %v1013, %v1021
    %v1023 = vadd.f32 %v1006, %v1022
    %v1024 = vtanh.pop %v1023
    %v1025 = vsub.f32 1.0, %v1020
    %v1026 = vmul.f32 %v1025, %v1024
    %v1027 = vmul.f32 %v1020, %v918
    %v1028 = vadd.f32 %v1026, %v1027
    %v1029 = vpack.c.bf16 %v1028, %v1028
    %s1030 = scalar_lea.vmem %s5, 12
    %1031 = vst [vmem:[%s1030] sm:$0xf] %v1029
    %1032 = vmatprep.subr.bf16.mxu0 %v547
    %1033 = vmatpush1.bf16.msra.mxu0 %v546
    %1034 = vmatprep.subr.bf16.mxu0 %v550
    %1035 = vmatpush1.bf16.msra.mxu0 %v549
    %1036 = vmatprep.subr.bf16.mxu0 %v553
    %1037 = vmatpush1.bf16.msra.mxu0 %v552
    %1038 = vmatprep.subr.bf16.mxu0 %v556
    %1039 = vmatpush1.bf16.msra.mxu0 %v555
    %1040 = vmatprep.subr.bf16.mxu0 %v559
    %1041 = vmatpush1.bf16.msra.mxu0 %v558
    %1042 = vmatprep.subr.bf16.mxu0 %v562
    %1043 = vmatpush1.bf16.msra.mxu0 %v561
    %1044 = vmatprep.subr.bf16.mxu0 %v565
    %1045 = vmatpush1.bf16.msra.mxu0 %v564
    %1046 = vmatprep.subr.bf16.mxu0 %v568
    %1047 = vmatpush1.bf16.msra.mxu0 %v567
    %1048 = vmatprep.subr.bf16.mxu0 0
    %1049 = vmatpush1.bf16.msra.mxu0 0
    %1050 = vmatprep.subr.bf16.mxu0 0
    %1051 = vmatpush1.bf16.msra.mxu0 0
    %1052 = vmatprep.subr.bf16.mxu0 0
    %1053 = vmatpush1.bf16.msra.mxu0 0
    %1054 = vmatprep.subr.bf16.mxu0 0
    %1055 = vmatpush1.bf16.msra.mxu0 0
    %1056 = vmatprep.subr.bf16.mxu0 0
    %1057 = vmatpush1.bf16.msra.mxu0 0
    %1058 = vmatprep.subr.bf16.mxu0 0
    %1059 = vmatpush1.bf16.msra.mxu0 0
    %1060 = vmatprep.subr.bf16.mxu0 0
    %1061 = vmatpush1.bf16.msra.mxu0 0
    %1062 = vmatprep.subr.bf16.mxu0 0
    %1063 = vmatpush1.bf16.msra.mxu0 0
    %1064 = vmatprep.mubr.bf16.mxu0 0
    %1065 = vmatmul.mubr.bf16.gmra.mrb[0].mxu0 %v1029
    %v1066 = vpop.f32.mrb[0].mxu0
    %v1067 = vadd.f32 0.0, %v1066
    %v1068 = vpop.f32.mrb[0].mxu0
    %v1069 = vadd.f32 0.0, %v1068
    %v1070 = vpop.f32.mrb[0].mxu0
    %v1071 = vpop.f32.mrb[0].mxu0
    %1072 = vdwg.mxu0
    %1073 = vmatprep.subr.bf16.mxu0 0
    %1074 = vmatpush1.bf16.msra.mxu0 %v548
    %1075 = vmatprep.subr.bf16.mxu0 0
    %1076 = vmatpush1.bf16.msra.mxu0 %v551
    %1077 = vmatprep.subr.bf16.mxu0 0
    %1078 = vmatpush1.bf16.msra.mxu0 %v554
    %1079 = vmatprep.subr.bf16.mxu0 0
    %1080 = vmatpush1.bf16.msra.mxu0 %v557
    %1081 = vmatprep.subr.bf16.mxu0 0
    %1082 = vmatpush1.bf16.msra.mxu0 %v560
    %1083 = vmatprep.subr.bf16.mxu0 0
    %1084 = vmatpush1.bf16.msra.mxu0 %v563
    %1085 = vmatprep.subr.bf16.mxu0 0
    %1086 = vmatpush1.bf16.msra.mxu0 %v566
    %1087 = vmatprep.subr.bf16.mxu0 0
    %1088 = vmatpush1.bf16.msra.mxu0 %v569
    %1089 = vmatprep.subr.bf16.mxu0 0
    %1090 = vmatpush1.bf16.msra.mxu0 0
    %1091 = vmatprep.subr.bf16.mxu0 0
    %1092 = vmatpush1.bf16.msra.mxu0 0
    %1093 = vmatprep.subr.bf16.mxu0 0
    %1094 = vmatpush1.bf16.msra.mxu0 0
    %1095 = vmatprep.subr.bf16.mxu0 0
    %1096 = vmatpush1.bf16.msra.mxu0 0
    %1097 = vmatprep.subr.bf16.mxu0 0
    %1098 = vmatpush1.bf16.msra.mxu0 0
    %1099 = vmatprep.subr.bf16.mxu0 0
    %1100 = vmatpush1.bf16.msra.mxu0 0
    %1101 = vmatprep.subr.bf16.mxu0 0
    %1102 = vmatpush1.bf16.msra.mxu0 0
    %1103 = vmatprep.subr.bf16.mxu0 0
    %1104 = vmatpush1.bf16.msra.mxu0 0
    %1105 = vmatprep.mubr.bf16.mxu0 0
    %1106 = vmatmul.mubr.bf16.gmra.mrb[0].mxu0 %v1029
    %v1107 = vpop.f32.mrb[0].mxu0
    %v1108 = vadd.f32 0.0, %v1107
    %v1109 = vpop.f32.mrb[0].mxu0
    %v1110 = vpop.f32.mrb[0].mxu0
    %v1111 = vpop.f32.mrb[0].mxu0
    %1112 = vdwg.mxu0
    %s1113 = scalar_lea.vmem [#allocation2], 96
    %v1114 = vld [vmem:[%s1113] sm:$0xff]
    %v1115 = vld [vmem:[%s1113 + $0x8] sm:$0xff]
    %v1116 = vld [vmem:[%s1113 + $0x10] sm:$0xff]
    %v1117 = vadd.f32 %v1114, %v1067
    %v1118 = vxor.u32 %v1117, 2147483648
    %v1119 = vmul.f32 %v1118, 1.442695
    %v1120 = vpow.pop %v1119
    %v1121 = vadd.f32 %v1120, 1.0
    %v1122 = vrcp.pop %v1121
    %v1123 = vmul.f32 1.0, %v1122
    %v1124 = vadd.f32 %v1115, %v1069
    %v1125 = vxor.u32 %v1124, 2147483648
    %v1126 = vmul.f32 %v1125, 1.442695
    %v1127 = vpow.pop %v1126
    %v1128 = vadd.f32 %v1127, 1.0
    %v1129 = vrcp.pop %v1128
    %v1130 = vmul.f32 1.0, %v1129
    %v1131 = vadd.f32 %v1108, %v462
    %v1132 = vmul.f32 %v1123, %v1131
    %v1133 = vadd.f32 %v1116, %v1132
    %v1134 = vtanh.pop %v1133
    %v1135 = vsub.f32 1.0, %v1130
    %v1136 = vmul.f32 %v1135, %v1134
    %v1137 = vmul.f32 %v1130, %v1028
    %v1138 = vadd.f32 %v1136, %v1137
    %v1139 = vpack.c.bf16 %v1138, %v1138
    %s1140 = scalar_lea.vmem %s5, 16
    %1141 = vst [vmem:[%s1140] sm:$0xf] %v1139
    %1142 = vmatprep.subr.bf16.mxu0 %v547
    %1143 = vmatpush1.bf16.msra.mxu0 %v546
    %1144 = vmatprep.subr.bf16.mxu0 %v550
    %1145 = vmatpush1.bf16.msra.mxu0 %v549
    %1146 = vmatprep.subr.bf16.mxu0 %v553
    %1147 = vmatpush1.bf16.msra.mxu0 %v552
    %1148 = vmatprep.subr.bf16.mxu0 %v556
    %1149 = vmatpush1.bf16.msra.mxu0 %v555
    %1150 = vmatprep.subr.bf16.mxu0 %v559
    %1151 = vmatpush1.bf16.msra.mxu0 %v558
    %1152 = vmatprep.subr.bf16.mxu0 %v562
    %1153 = vmatpush1.bf16.msra.mxu0 %v561
    %1154 = vmatprep.subr.bf16.mxu0 %v565
    %1155 = vmatpush1.bf16.msra.mxu0 %v564
    %1156 = vmatprep.subr.bf16.mxu0 %v568
    %1157 = vmatpush1.bf16.msra.mxu0 %v567
    %1158 = vmatprep.subr.bf16.mxu0 0
    %1159 = vmatpush1.bf16.msra.mxu0 0
    %1160 = vmatprep.subr.bf16.mxu0 0
    %1161 = vmatpush1.bf16.msra.mxu0 0
    %1162 = vmatprep.subr.bf16.mxu0 0
    %1163 = vmatpush1.bf16.msra.mxu0 0
    %1164 = vmatprep.subr.bf16.mxu0 0
    %1165 = vmatpush1.bf16.msra.mxu0 0
    %1166 = vmatprep.subr.bf16.mxu0 0
    %1167 = vmatpush1.bf16.msra.mxu0 0
    %1168 = vmatprep.subr.bf16.mxu0 0
    %1169 = vmatpush1.bf16.msra.mxu0 0
    %1170 = vmatprep.subr.bf16.mxu0 0
    %1171 = vmatpush1.bf16.msra.mxu0 0
    %1172 = vmatprep.subr.bf16.mxu0 0
    %1173 = vmatpush1.bf16.msra.mxu0 0
    %1174 = vmatprep.mubr.bf16.mxu0 0
    %1175 = vmatmul.mubr.bf16.gmra.mrb[0].mxu0 %v1139
    %v1176 = vpop.f32.mrb[0].mxu0
    %v1177 = vadd.f32 0.0, %v1176
    %v1178 = vpop.f32.mrb[0].mxu0
    %v1179 = vadd.f32 0.0, %v1178
    %v1180 = vpop.f32.mrb[0].mxu0
    %v1181 = vpop.f32.mrb[0].mxu0
    %1182 = vdwg.mxu0
    %1183 = vmatprep.subr.bf16.mxu0 0
    %1184 = vmatpush1.bf16.msra.mxu0 %v548
    %1185 = vmatprep.subr.bf16.mxu0 0
    %1186 = vmatpush1.bf16.msra.mxu0 %v551
    %1187 = vmatprep.subr.bf16.mxu0 0
    %1188 = vmatpush1.bf16.msra.mxu0 %v554
    %1189 = vmatprep.subr.bf16.mxu0 0
    %1190 = vmatpush1.bf16.msra.mxu0 %v557
    %1191 = vmatprep.subr.bf16.mxu0 0
    %1192 = vmatpush1.bf16.msra.mxu0 %v560
    %1193 = vmatprep.subr.bf16.mxu0 0
    %1194 = vmatpush1.bf16.msra.mxu0 %v563
    %1195 = vmatprep.subr.bf16.mxu0 0
    %1196 = vmatpush1.bf16.msra.mxu0 %v566
    %1197 = vmatprep.subr.bf16.mxu0 0
    %1198 = vmatpush1.bf16.msra.mxu0 %v569
    %1199 = vmatprep.subr.bf16.mxu0 0
    %1200 = vmatpush1.bf16.msra.mxu0 0
    %1201 = vmatprep.subr.bf16.mxu0 0
    %1202 = vmatpush1.bf16.msra.mxu0 0
    %1203 = vmatprep.subr.bf16.mxu0 0
    %1204 = vmatpush1.bf16.msra.mxu0 0
    %1205 = vmatprep.subr.bf16.mxu0 0
    %1206 = vmatpush1.bf16.msra.mxu0 0
    %1207 = vmatprep.subr.bf16.mxu0 0
    %1208 = vmatpush1.bf16.msra.mxu0 0
    %1209 = vmatprep.subr.bf16.mxu0 0
    %1210 = vmatpush1.bf16.msra.mxu0 0
    %1211 = vmatprep.subr.bf16.mxu0 0
    %1212 = vmatpush1.bf16.msra.mxu0 0
    %1213 = vmatprep.subr.bf16.mxu0 0
    %1214 = vmatpush1.bf16.msra.mxu0 0
    %1215 = vmatprep.mubr.bf16.mxu0 0
    %1216 = vmatmul.mubr.bf16.gmra.mrb[0].mxu0 %v1139
    %v1217 = vpop.f32.mrb[0].mxu0
    %v1218 = vadd.f32 0.0, %v1217
    %v1219 = vpop.f32.mrb[0].mxu0
    %v1220 = vpop.f32.mrb[0].mxu0
    %v1221 = vpop.f32.mrb[0].mxu0
    %1222 = vdwg.mxu0
    %s1223 = scalar_lea.vmem [#allocation2], 120
    %v1224 = vld [vmem:[%s1223] sm:$0xff]
    %v1225 = vld [vmem:[%s1223 + $0x8] sm:$0xff]
    %v1226 = vld [vmem:[%s1223 + $0x10] sm:$0xff]
    %v1227 = vadd.f32 %v1224, %v1177
    %v1228 = vxor.u32 %v1227, 2147483648
    %v1229 = vmul.f32 %v1228, 1.442695
    %v1230 = vpow.pop %v1229
    %v1231 = vadd.f32 %v1230, 1.0
    %v1232 = vrcp.pop %v1231
    %v1233 = vmul.f32 1.0, %v1232
    %v1234 = vadd.f32 %v1225, %v1179
    %v1235 = vxor.u32 %v1234, 2147483648
    %v1236 = vmul.f32 %v1235, 1.442695
    %v1237 = vpow.pop %v1236
    %v1238 = vadd.f32 %v1237, 1.0
    %v1239 = vrcp.pop %v1238
    %v1240 = vmul.f32 1.0, %v1239
    %v1241 = vadd.f32 %v1218, %v462
    %v1242 = vmul.f32 %v1233, %v1241
    %v1243 = vadd.f32 %v1226, %v1242
    %v1244 = vtanh.pop %v1243
    %v1245 = vsub.f32 1.0, %v1240
    %v1246 = vmul.f32 %v1245, %v1244
    %v1247 = vmul.f32 %v1240, %v1138
    %v1248 = vadd.f32 %v1246, %v1247
    %v1249 = vpack.c.bf16 %v1248, %v1248
    %s1250 = scalar_lea.vmem %s5, 20
    %1251 = vst [vmem:[%s1250] sm:$0xf] %v1249
    %1252 = vmatprep.subr.bf16.mxu0 %v547
    %1253 = vmatpush1.bf16.msra.mxu0 %v546
    %1254 = vmatprep.subr.bf16.mxu0 %v550
    %1255 = vmatpush1.bf16.msra.mxu0 %v549
    %1256 = vmatprep.subr.bf16.mxu0 %v553
    %1257 = vmatpush1.bf16.msra.mxu0 %v552
    %1258 = vmatprep.subr.bf16.mxu0 %v556
    %1259 = vmatpush1.bf16.msra.mxu0 %v555
    %1260 = vmatprep.subr.bf16.mxu0 %v559
    %1261 = vmatpush1.bf16.msra.mxu0 %v558
    %1262 = vmatprep.subr.bf16.mxu0 %v562
    %1263 = vmatpush1.bf16.msra.mxu0 %v561
    %1264 = vmatprep.subr.bf16.mxu0 %v565
    %1265 = vmatpush1.bf16.msra.mxu0 %v564
    %1266 = vmatprep.subr.bf16.mxu0 %v568
    %1267 = vmatpush1.bf16.msra.mxu0 %v567
    %1268 = vmatprep.subr.bf16.mxu0 0
    %1269 = vmatpush1.bf16.msra.mxu0 0
    %1270 = vmatprep.subr.bf16.mxu0 0
    %1271 = vmatpush1.bf16.msra.mxu0 0
    %1272 = vmatprep.subr.bf16.mxu0 0
    %1273 = vmatpush1.bf16.msra.mxu0 0
    %1274 = vmatprep.subr.bf16.mxu0 0
    %1275 = vmatpush1.bf16.msra.mxu0 0
    %1276 = vmatprep.subr.bf16.mxu0 0
    %1277 = vmatpush1.bf16.msra.mxu0 0
    %1278 = vmatprep.subr.bf16.mxu0 0
    %1279 = vmatpush1.bf16.msra.mxu0 0
    %1280 = vmatprep.subr.bf16.mxu0 0
    %1281 = vmatpush1.bf16.msra.mxu0 0
    %1282 = vmatprep.subr.bf16.mxu0 0
    %1283 = vmatpush1.bf16.msra.mxu0 0
    %1284 = vmatprep.mubr.bf16.mxu0 0
    %1285 = vmatmul.mubr.bf16.gmra.mrb[0].mxu0 %v1249
    %v1286 = vpop.f32.mrb[0].mxu0
    %v1287 = vadd.f32 0.0, %v1286
    %v1288 = vpop.f32.mrb[0].mxu0
    %v1289 = vadd.f32 0.0, %v1288
    %v1290 = vpop.f32.mrb[0].mxu0
    %v1291 = vpop.f32.mrb[0].mxu0
    %1292 = vdwg.mxu0
    %1293 = vmatprep.subr.bf16.mxu0 0
    %1294 = vmatpush1.bf16.msra.mxu0 %v548
    %1295 = vmatprep.subr.bf16.mxu0 0
    %1296 = vmatpush1.bf16.msra.mxu0 %v551
    %1297 = vmatprep.subr.bf16.mxu0 0
    %1298 = vmatpush1.bf16.msra.mxu0 %v554
    %1299 = vmatprep.subr.bf16.mxu0 0
    %1300 = vmatpush1.bf16.msra.mxu0 %v557
    %1301 = vmatprep.subr.bf16.mxu0 0
    %1302 = vmatpush1.bf16.msra.mxu0 %v560
    %1303 = vmatprep.subr.bf16.mxu0 0
    %1304 = vmatpush1.bf16.msra.mxu0 %v563
    %1305 = vmatprep.subr.bf16.mxu0 0
    %1306 = vmatpush1.bf16.msra.mxu0 %v566
    %1307 = vmatprep.subr.bf16.mxu0 0
    %1308 = vmatpush1.bf16.msra.mxu0 %v569
    %1309 = vmatprep.subr.bf16.mxu0 0
    %1310 = vmatpush1.bf16.msra.mxu0 0
    %1311 = vmatprep.subr.bf16.mxu0 0
    %1312 = vmatpush1.bf16.msra.mxu0 0
    %1313 = vmatprep.subr.bf16.mxu0 0
    %1314 = vmatpush1.bf16.msra.mxu0 0
    %1315 = vmatprep.subr.bf16.mxu0 0
    %1316 = vmatpush1.bf16.msra.mxu0 0
    %1317 = vmatprep.subr.bf16.mxu0 0
    %1318 = vmatpush1.bf16.msra.mxu0 0
    %1319 = vmatprep.subr.bf16.mxu0 0
    %1320 = vmatpush1.bf16.msra.mxu0 0
    %1321 = vmatprep.subr.bf16.mxu0 0
    %1322 = vmatpush1.bf16.msra.mxu0 0
    %1323 = vmatprep.subr.bf16.mxu0 0
    %1324 = vmatpush1.bf16.msra.mxu0 0
    %1325 = vmatprep.mubr.bf16.mxu0 0
    %1326 = vmatmul.mubr.bf16.gmra.mrb[0].mxu0 %v1249
    %v1327 = vpop.f32.mrb[0].mxu0
    %v1328 = vadd.f32 0.0, %v1327
    %v1329 = vpop.f32.mrb[0].mxu0
    %v1330 = vpop.f32.mrb[0].mxu0
    %v1331 = vpop.f32.mrb[0].mxu0
    %1332 = vdwg.mxu0
    %s1333 = scalar_lea.vmem [#allocation2], 144
    %v1334 = vld [vmem:[%s1333] sm:$0xff]
    %v1335 = vld [vmem:[%s1333 + $0x8] sm:$0xff]
    %v1336 = vld [vmem:[%s1333 + $0x10] sm:$0xff]
    %v1337 = vadd.f32 %v1334, %v1287
    %v1338 = vxor.u32 %v1337, 2147483648
    %v1339 = vmul.f32 %v1338, 1.442695
    %v1340 = vpow.pop %v1339
    %v1341 = vadd.f32 %v1340, 1.0
    %v1342 = vrcp.pop %v1341
    %v1343 = vmul.f32 1.0, %v1342
    %v1344 = vadd.f32 %v1335, %v1289
    %v1345 = vxor.u32 %v1344, 2147483648
    %v1346 = vmul.f32 %v1345, 1.442695
    %v1347 = vpow.pop %v1346
    %v1348 = vadd.f32 %v1347, 1.0
    %v1349 = vrcp.pop %v1348
    %v1350 = vmul.f32 1.0, %v1349
    %v1351 = vadd.f32 %v1328, %v462
    %v1352 = vmul.f32 %v1343, %v1351
    %v1353 = vadd.f32 %v1336, %v1352
    %v1354 = vtanh.pop %v1353
    %v1355 = vsub.f32 1.0, %v1350
    %v1356 = vmul.f32 %v1355, %v1354
    %v1357 = vmul.f32 %v1350, %v1248
    %v1358 = vadd.f32 %v1356, %v1357
    %v1359 = vpack.c.bf16 %v1358, %v1358
    %s1360 = scalar_lea.vmem %s5, 24
    %1361 = vst [vmem:[%s1360] sm:$0xf] %v1359
    %1362 = vmatprep.subr.bf16.mxu0 %v547
    %1363 = vmatpush1.bf16.msra.mxu0 %v546
    %1364 = vmatprep.subr.bf16.mxu0 %v550
    %1365 = vmatpush1.bf16.msra.mxu0 %v549
    %1366 = vmatprep.subr.bf16.mxu0 %v553
    %1367 = vmatpush1.bf16.msra.mxu0 %v552
    %1368 = vmatprep.subr.bf16.mxu0 %v556
    %1369 = vmatpush1.bf16.msra.mxu0 %v555
    %1370 = vmatprep.subr.bf16.mxu0 %v559
    %1371 = vmatpush1.bf16.msra.mxu0 %v558
    %1372 = vmatprep.subr.bf16.mxu0 %v562
    %1373 = vmatpush1.bf16.msra.mxu0 %v561
    %1374 = vmatprep.subr.bf16.mxu0 %v565
    %1375 = vmatpush1.bf16.msra.mxu0 %v564
    %1376 = vmatprep.subr.bf16.mxu0 %v568
    %1377 = vmatpush1.bf16.msra.mxu0 %v567
    %1378 = vmatprep.subr.bf16.mxu0 0
    %1379 = vmatpush1.bf16.msra.mxu0 0
    %1380 = vmatprep.subr.bf16.mxu0 0
    %1381 = vmatpush1.bf16.msra.mxu0 0
    %1382 = vmatprep.subr.bf16.mxu0 0
    %1383 = vmatpush1.bf16.msra.mxu0 0
    %1384 = vmatprep.subr.bf16.mxu0 0
    %1385 = vmatpush1.bf16.msra.mxu0 0
    %1386 = vmatprep.subr.bf16.mxu0 0
    %1387 = vmatpush1.bf16.msra.mxu0 0
    %1388 = vmatprep.subr.bf16.mxu0 0
    %1389 = vmatpush1.bf16.msra.mxu0 0
    %1390 = vmatprep.subr.bf16.mxu0 0
    %1391 = vmatpush1.bf16.msra.mxu0 0
    %1392 = vmatprep.subr.bf16.mxu0 0
    %1393 = vmatpush1.bf16.msra.mxu0 0
    %1394 = vmatprep.mubr.bf16.mxu0 0
    %1395 = vmatmul.mubr.bf16.gmra.mrb[0].mxu0 %v1359
    %v1396 = vpop.f32.mrb[0].mxu0
    %v1397 = vadd.f32 0.0, %v1396
    %v1398 = vpop.f32.mrb[0].mxu0
    %v1399 = vadd.f32 0.0, %v1398
    %v1400 = vpop.f32.mrb[0].mxu0
    %v1401 = vpop.f32.mrb[0].mxu0
    %1402 = vdwg.mxu0
    %1403 = vmatprep.subr.bf16.mxu0 0
    %1404 = vmatpush1.bf16.msra.mxu0 %v548
    %1405 = vmatprep.subr.bf16.mxu0 0
    %1406 = vmatpush1.bf16.msra.mxu0 %v551
    %1407 = vmatprep.subr.bf16.mxu0 0
    %1408 = vmatpush1.bf16.msra.mxu0 %v554
    %1409 = vmatprep.subr.bf16.mxu0 0
    %1410 = vmatpush1.bf16.msra.mxu0 %v557
    %1411 = vmatprep.subr.bf16.mxu0 0
    %1412 = vmatpush1.bf16.msra.mxu0 %v560
    %1413 = vmatprep.subr.bf16.mxu0 0
    %1414 = vmatpush1.bf16.msra.mxu0 %v563
    %1415 = vmatprep.subr.bf16.mxu0 0
    %1416 = vmatpush1.bf16.msra.mxu0 %v566
    %1417 = vmatprep.subr.bf16.mxu0 0
    %1418 = vmatpush1.bf16.msra.mxu0 %v569
    %1419 = vmatprep.subr.bf16.mxu0 0
    %1420 = vmatpush1.bf16.msra.mxu0 0
    %1421 = vmatprep.subr.bf16.mxu0 0
    %1422 = vmatpush1.bf16.msra.mxu0 0
    %1423 = vmatprep.subr.bf16.mxu0 0
    %1424 = vmatpush1.bf16.msra.mxu0 0
    %1425 = vmatprep.subr.bf16.mxu0 0
    %1426 = vmatpush1.bf16.msra.mxu0 0
    %1427 = vmatprep.subr.bf16.mxu0 0
    %1428 = vmatpush1.bf16.msra.mxu0 0
    %1429 = vmatprep.subr.bf16.mxu0 0
    %1430 = vmatpush1.bf16.msra.mxu0 0
    %1431 = vmatprep.subr.bf16.mxu0 0
    %1432 = vmatpush1.bf16.msra.mxu0 0
    %1433 = vmatprep.subr.bf16.mxu0 0
    %1434 = vmatpush1.bf16.msra.mxu0 0
    %1435 = vmatprep.mubr.bf16.mxu0 0
    %1436 = vmatmul.mubr.bf16.gmra.mrb[0].mxu0 %v1359
    %v1437 = vpop.f32.mrb[0].mxu0
    %v1438 = vadd.f32 0.0, %v1437
    %v1439 = vpop.f32.mrb[0].mxu0
    %v1440 = vpop.f32.mrb[0].mxu0
    %v1441 = vpop.f32.mrb[0].mxu0
    %1442 = vdwg.mxu0
    %s1443 = scalar_lea.vmem [#allocation2], 168
    %v1444 = vld [vmem:[%s1443] sm:$0xff]
    %v1445 = vld [vmem:[%s1443 + $0x8] sm:$0xff]
    %v1446 = vld [vmem:[%s1443 + $0x10] sm:$0xff]
    %v1447 = vadd.f32 %v1444, %v1397
    %v1448 = vxor.u32 %v1447, 2147483648
    %v1449 = vmul.f32 %v1448, 1.442695
    %v1450 = vpow.pop %v1449
    %v1451 = vadd.f32 %v1450, 1.0
    %v1452 = vrcp.pop %v1451
    %v1453 = vmul.f32 1.0, %v1452
    %v1454 = vadd.f32 %v1445, %v1399
    %v1455 = vxor.u32 %v1454, 2147483648
    %v1456 = vmul.f32 %v1455, 1.442695
    %v1457 = vpow.pop %v1456
    %v1458 = vadd.f32 %v1457, 1.0
    %v1459 = vrcp.pop %v1458
    %v1460 = vmul.f32 1.0, %v1459
    %v1461 = vadd.f32 %v1438, %v462
    %v1462 = vmul.f32 %v1453, %v1461
    %v1463 = vadd.f32 %v1446, %v1462
    %v1464 = vtanh.pop %v1463
    %v1465 = vsub.f32 1.0, %v1460
    %v1466 = vmul.f32 %v1465, %v1464
    %v1467 = vmul.f32 %v1460, %v1358
    %v1468 = vadd.f32 %v1466, %v1467
    %v1469 = vpack.c.bf16 %v1468, %v1468
    %s1470 = scalar_lea.vmem %s5, 28
    %1471 = vst [vmem:[%s1470] sm:$0xf] %v1469
    %1472 = vst [vmem:[#allocation3] sm:$0xff] %v1468
    // Predicated region
    $region34: #{_encoder_forward.1} parent=1 // pred_check
      _
    $region35: #{_encoder_forward.1} parent=1 // pred_check_branch
      %1474 = sbr.rel (0) target = $region37
    $region36: #{_encoder_forward.1} parent=1 // pred_region
      _
    $region37: #{_encoder_forward.1} parent=1 // pred_fallthru
      _
    // Predicated region
    $region38: #{_encoder_forward.1} parent=1 // pred_check
      _
    $region39: #{_encoder_forward.1} parent=1 // pred_check_branch
      %1476 = sbr.rel (0) target = $region41
    $region40: #{_encoder_forward.1} parent=1 // pred_region
      _
    $region41: #{_encoder_forward.1} parent=1 // pred_fallthru
      _
    %1477 = vsyncpa [#allocation5], 1
    %1478 = vsyncpa [#allocation7], 1

</llo_original>
